<compile_context>
chip_gen: v7x
topology: tpu7x:2x2x1
jax: 0.10.0
libtpu: 0.0.40
codegen_flags: <defaults>
</compile_context>

<pallas_src>
import functools
import math

import jax
import jax.numpy as jnp
from jax import lax
from jax.experimental import pallas as pl
from jax.experimental.pallas import tpu as pltpu


VMEM_SPEC = pl.BlockSpec(memory_space=pltpu.MemorySpace.VMEM)


def _round_up(n, m):
    return (n + m - 1) // m * m


# ----------------------------- Pallas kernels -----------------------------

def _conv_mm_kernel(x_ref, w_ref, b_ref, *rest, apply_elu, has_add):
    # x: (KC_pad, tn) bf16   w: (Cout_pad, KC_pad) bf16   b: (Cout_pad, 1) f32
    # optional add: (Cout_pad, tn) f32   out: (Cout_pad, tn) f32
    if has_add:
        add_ref, o_ref = rest
    else:
        (o_ref,) = rest
    x = x_ref[...]
    if apply_elu:
        xf = x.astype(jnp.float32)
        xf = jnp.where(xf > 0, xf, jnp.exp(jnp.minimum(xf, 0.0)) - 1.0)  # ELU(alpha=1)
        x = xf.astype(jnp.bfloat16)
    acc = jnp.dot(w_ref[...], x, preferred_element_type=jnp.float32) + b_ref[...]
    if has_add:
        acc = acc + add_ref[...]
    o_ref[...] = acc


def _make_lstm_recurrence_kernel(add_residual):
    def kernel(*refs):
        if add_residual:
            xg_ref, wh_ref, x0_ref, o_ref = refs
        else:
            xg_ref, wh_ref, o_ref = refs
            x0_ref = None
        T, B, G = xg_ref.shape
        D = G // 4
        wh = wh_ref[...]  # (D, 4D) bf16, resident across the time loop

        def step(t, carry):
            h, c = carry
            gates = xg_ref[t] + jnp.dot(h.astype(jnp.bfloat16), wh,
                                        preferred_element_type=jnp.float32)
            i_g = jax.nn.sigmoid(gates[:, 0 * D:1 * D])
            f_g = jax.nn.sigmoid(gates[:, 1 * D:2 * D])
            g_g = jnp.tanh(gates[:, 2 * D:3 * D])
            o_g = jax.nn.sigmoid(gates[:, 3 * D:4 * D])
            c_new = f_g * c + i_g * g_g
            h_new = o_g * jnp.tanh(c_new)
            if add_residual:
                o_ref[t] = h_new + x0_ref[t]
            else:
                o_ref[t] = h_new
            return (h_new, c_new)

        h0 = jnp.zeros((B, D), jnp.float32)
        lax.fori_loop(0, T, step, (h0, h0))

    return kernel


# ----------------------------- Pallas wrappers -----------------------------

def _pallas_conv_matmul(x2d, w2d, b, add2d=None, apply_elu=False):
    """(Cout, KC) @ (KC, N) + b, tiled over N, bf16 MXU inputs, f32 accumulation."""
    cout, kc = w2d.shape
    n = x2d.shape[1]

    kc_p = _round_up(kc, 8)
    cout_p = _round_up(cout, 8)
    n_p = _round_up(n, 128)
    tn = 512 if n_p % 512 == 0 else (256 if n_p % 256 == 0 else 128)
    grid = (n_p // tn,)

    x_p = jnp.pad(x2d.astype(jnp.bfloat16), ((0, kc_p - kc), (0, n_p - n)))
    w_p = jnp.pad(w2d.astype(jnp.bfloat16), ((0, cout_p - cout), (0, kc_p - kc)))
    b_p = jnp.pad(b.astype(jnp.float32), (0, cout_p - cout)).reshape(cout_p, 1)

    inputs = [x_p, w_p, b_p]
    in_specs = [
        pl.BlockSpec((kc_p, tn), lambda j: (0, j)),
        pl.BlockSpec((cout_p, kc_p), lambda j: (0, 0)),   # weight resident across tiles
        pl.BlockSpec((cout_p, 1), lambda j: (0, 0)),
    ]
    has_add = add2d is not None
    if has_add:
        a_p = jnp.pad(add2d.astype(jnp.float32), ((0, cout_p - cout), (0, n_p - n)))
        inputs.append(a_p)
        in_specs.append(pl.BlockSpec((cout_p, tn), lambda j: (0, j)))

    flops = 2 * cout_p * kc_p * n_p
    bytes_accessed = (kc_p * n_p * 2 + cout_p * kc_p * 2 + cout_p * n_p * 4
                      + (cout_p * n_p * 4 if has_add else 0))

    out = pl.pallas_call(
        functools.partial(_conv_mm_kernel, apply_elu=apply_elu, has_add=has_add),
        out_shape=jax.ShapeDtypeStruct((cout_p, n_p), jnp.float32),
        grid=grid,
        in_specs=in_specs,
        out_specs=pl.BlockSpec((cout_p, tn), lambda j: (0, j)),
        compiler_params=pltpu.CompilerParams(
            dimension_semantics=("parallel",),
            vmem_limit_bytes=32 * 1024 * 1024,
        ),
        cost_estimate=pl.CostEstimate(
            flops=flops,
            transcendentals=kc_p * n_p if apply_elu else 0,
            bytes_accessed=bytes_accessed,
        ),
    )(*inputs)
    return out[:cout, :n]


def pallas_lstm_recurrence(xg, wh_bf16, x0=None):
    """xg: (T, B, 4D) precomputed input gates (+bias); wh: (D, 4D) bf16; x0: optional residual."""
    T, B, G = xg.shape
    D = G // 4
    add_residual = x0 is not None
    inputs = [xg, wh_bf16] + ([x0] if add_residual else [])
    return pl.pallas_call(
        _make_lstm_recurrence_kernel(add_residual),
        out_shape=jax.ShapeDtypeStruct((T, B, D), jnp.float32),
        in_specs=[VMEM_SPEC] * len(inputs),
        out_specs=VMEM_SPEC,
    )(*inputs)


# ----------------------------- glue: padding / im2col -----------------------------

def _pad1d(x, padding_left, padding_right, mode):
    """Matches EncodecConv1d._pad1d (reflect with small-input fixup)."""
    if mode == "reflect":
        length = x.shape[-1]
        max_pad = max(padding_left, padding_right)
        extra_pad = 0
        if length <= max_pad:
            extra_pad = max_pad - length + 1
            x = jnp.pad(x, ((0, 0), (0, 0), (0, extra_pad)))
        padded = jnp.pad(x, ((0, 0), (0, 0), (padding_left, padding_right)), mode="reflect")
        end = padded.shape[-1] - extra_pad
        return padded[..., :end]
    return jnp.pad(x, ((0, 0), (0, 0), (padding_left, padding_right)))


def encodec_conv1d(x, w, b, stride, dilation, cfg, apply_elu=False, add=None):
    """x: (B, Cin, T), w: (Cout, Cin, K), b: (Cout,) -> (B, Cout, T_out).

    apply_elu fuses a pre-activation ELU on the input; add fuses a residual add
    (shape (B, Cout, T_out)) into the matmul epilogue.
    """
    B, cin, T = x.shape
    cout, _, K = w.shape
    k_eff = (K - 1) * dilation + 1
    padding_total = k_eff - stride

    # exact-integer version of HF's float n_frames formula
    num = T - k_eff + padding_total
    n_frames = -(-num // stride)                       # ceil(num / stride)
    ideal_length = n_frames * stride + k_eff - padding_total
    extra_padding = int(ideal_length - T)

    if cfg.use_causal_conv:
        x = _pad1d(x, padding_total, extra_padding, cfg.pad_mode)
    else:
        padding_right = padding_total // 2
        padding_left = padding_total - padding_right
        x = _pad1d(x, padding_left, padding_right + extra_padding, cfg.pad_mode)

    T_pad = x.shape[-1]
    T_out = (T_pad - k_eff) // stride + 1

    cols = [
        lax.slice_in_dim(x, k * dilation, k * dilation + (T_out - 1) * stride + 1,
                         stride=stride, axis=2)
        for k in range(K)
    ]
    x_cols = jnp.stack(cols, axis=1)                                   # (B, K, Cin, T_out)
    x2d = jnp.transpose(x_cols, (1, 2, 0, 3)).reshape(K * cin, B * T_out)
    w2d = jnp.transpose(w, (0, 2, 1)).reshape(cout, K * cin)

    add2d = None
    if add is not None:
        assert add.shape == (B, cout, T_out), (add.shape, (B, cout, T_out))
        add2d = jnp.transpose(add, (1, 0, 2)).reshape(cout, B * T_out)

    out2d = _pallas_conv_matmul(x2d, w2d, b, add2d=add2d, apply_elu=apply_elu)
    return jnp.transpose(out2d.reshape(cout, B, T_out), (1, 0, 2))


def encodec_conv_transpose1d(x, w, b, stride, cfg, apply_elu=False):
    """Polyphase ConvTranspose1d. x: (B, Cin, T), w: (Cin, Cout, K) (torch layout), b: (Cout,)."""
    B, cin, T = x.shape
    _, cout, K = w.shape
    s = stride
    padding_total = K - s
    assert K % s == 0, "polyphase lowering requires kernel_size % stride == 0"
    m = K // s  # taps per output phase (Encodec: K = 2*stride -> m = 2)

    # im2col of x with m taps (stride-1 conv per phase), zero-pad (m-1) both sides
    x_p = jnp.pad(x, ((0, 0), (0, 0), (m - 1, m - 1)))
    Tq = T + m - 1
    cols = [lax.slice_in_dim(x_p, r, r + Tq, axis=2) for r in range(m)]
    x_cols = jnp.stack(cols, axis=1)                                   # (B, m, Cin, Tq)
    x2d = jnp.transpose(x_cols, (1, 2, 0, 3)).reshape(m * cin, B * Tq)

    # big weight: row (co, p), col (r, ci) -> w[ci, co, (m-1-r)*s + p]
    w_r = w.reshape(cin, cout, m, s)                   # k = d*s + p
    w_big = jnp.transpose(w_r[:, :, ::-1, :], (1, 3, 2, 0))            # (Cout, s, m, Cin)
    w2d = w_big.reshape(cout * s, m * cin)
    b_big = jnp.repeat(b, s)                                           # bias per (co, p)

    out2d = _pallas_conv_matmul(x2d, w2d, b_big, apply_elu=apply_elu)  # (Cout*s, B*Tq)
    out_big = out2d.reshape(cout, s, B, Tq)
    out = jnp.transpose(out_big, (2, 0, 3, 1)).reshape(B, cout, Tq * s)  # len = (T-1)*s + K

    if cfg.use_causal_conv:
        padding_right = math.ceil(padding_total * cfg.trim_right_ratio)
    else:
        padding_right = padding_total // 2
    padding_left = padding_total - padding_right
    end = out.shape[-1] - padding_right
    return out[..., padding_left:end]


def encodec_lstm(x_bct, layers):
    if not layers:
        return x_bct
    x0 = jnp.transpose(x_bct, (2, 0, 1))               # (T, B, D)
    T, B, D = x0.shape
    h = x0
    for li, layer in enumerate(layers):
        # hoisted input projection: one gridded MXU matmul over all timesteps
        x2d = jnp.transpose(h.reshape(T * B, D))       # (D, T*B)
        xg2d = _pallas_conv_matmul(x2d, layer["wi_t"], layer["b"])     # (4D, T*B) f32
        xg = jnp.transpose(xg2d).reshape(T, B, 4 * D)
        last = li == len(layers) - 1
        h = pallas_lstm_recurrence(
            xg, layer["wh"].astype(jnp.bfloat16), x0 if last else None)
    return jnp.transpose(h, (1, 2, 0))                 # back to (B, C, T)


def resnet_block(x, rb, dilations, cfg):
    # shortcut path first, so its output can be fused into the last block conv
    if "shortcut" in rb:
        sc = encodec_conv1d(x, rb["shortcut"]["w"], rb["shortcut"]["b"],
                            stride=1, dilation=1, cfg=cfg)
    else:
        sc = x
    h = x
    n = len(rb["block"])
    for i, conv in enumerate(rb["block"]):
        h = encodec_conv1d(h, conv["w"], conv["b"], stride=1, dilation=dilations[i],
                           cfg=cfg, apply_elu=True,
                           add=sc if i == n - 1 else None)
    return h


def encodec_decoder(x, params, cfg):
    h = encodec_conv1d(x, params["conv_in"]["w"], params["conv_in"]["b"],
                       stride=1, dilation=1, cfg=cfg)
    h = encodec_lstm(h, params["lstm"])
    for stage, ratio in zip(params["stages"], cfg.upsampling_ratios):
        h = encodec_conv_transpose1d(h, stage["up"]["w"], stage["up"]["b"],
                                     stride=ratio, cfg=cfg, apply_elu=True)
        for j, rb in enumerate(stage["resblocks"]):
            dilations = (cfg.dilation_growth_rate ** j, 1)
            h = resnet_block(h, rb, dilations, cfg)
    h = encodec_conv1d(h, params["conv_out"]["w"], params["conv_out"]["b"],
                       stride=1, dilation=1, cfg=cfg, apply_elu=True)
    return h


# ----------------------------- config & params -----------------------------

class Cfg:
    hidden_size = 32
    num_filters = 8
    upsampling_ratios = (2, 2)
    kernel_size = 7
    last_kernel_size = 7
    residual_kernel_size = 3
    dilation_growth_rate = 2
    num_residual_layers = 1
    num_lstm_layers = 2
    compress = 2
    audio_channels = 1
    use_causal_conv = True
    pad_mode = "reflect"
    trim_right_ratio = 1.0
    norm_type = "weight_norm"
    use_conv_shortcut = True


def init_decoder_params(cfg, key):
    keys = iter(jax.random.split(key, 256))

    def nk():
        return next(keys)

    def conv_p(cout, cin, k):
        w = jax.random.normal(nk(), (cout, cin, k), jnp.float32) / math.sqrt(cin * k)
        b = 0.01 * jax.random.normal(nk(), (cout,), jnp.float32)
        return {"w": w, "b": b}

    def convT_p(cin, cout, k):
        # torch ConvTranspose1d weight layout: (Cin, Cout, K)
        w = jax.random.normal(nk(), (cin, cout, k), jnp.float32) / math.sqrt(cin * k)
        b = 0.01 * jax.random.normal(nk(), (cout,), jnp.float32)
        return {"w": w, "b": b}

    def lstm_p(d):
        layers = []
        for _ in range(cfg.num_lstm_layers):
            wi_t = jax.random.normal(nk(), (4 * d, d), jnp.float32) / math.sqrt(d)
            wh = jax.random.normal(nk(), (d, 4 * d), jnp.float32) / math.sqrt(d)
            b = 0.01 * jax.random.normal(nk(), (4 * d,), jnp.float32)
            layers.append({"wi_t": wi_t, "wh": wh, "b": b})
        return layers

    scaling = int(2 ** len(cfg.upsampling_ratios))
    params = {
        "conv_in": conv_p(scaling * cfg.num_filters, cfg.hidden_size, cfg.kernel_size),
        "lstm": lstm_p(scaling * cfg.num_filters),
        "stages": [],
    }
    for ratio in cfg.upsampling_ratios:
        current = scaling * cfg.num_filters
        stage = {"up": convT_p(current, current // 2, ratio * 2), "resblocks": []}
        dim = current // 2
        hidden = dim // cfg.compress
        for j in range(cfg.num_residual_layers):
            ksz = (cfg.residual_kernel_size, 1)
            chs = [dim, hidden, dim]
            block = [conv_p(chs[i + 1], chs[i], k) for i, k in enumerate(ksz)]
            rb = {"block": block}
            if cfg.use_conv_shortcut:
                rb["shortcut"] = conv_p(dim, dim, 1)
            stage["resblocks"].append(rb)
        params["stages"].append(stage)
        scaling //= 2
    params["conv_out"] = conv_p(cfg.audio_channels, cfg.num_filters, cfg.last_kernel_size)
    return params


# ----------------------------- main -----------------------------

if __name__ == "__main__":
    cfg = Cfg()
    key = jax.random.PRNGKey(0)
    k_params, k_input = jax.random.split(key)

    params = init_decoder_params(cfg, k_params)

    B, T = 2, 8
    hidden_states = jax.random.normal(k_input, (B, cfg.hidden_size, T), jnp.float32)

    decode = jax.jit(functools.partial(encodec_decoder, cfg=cfg))
    out = decode(hidden_states, params)
    out = jax.block_until_ready(out)

    # upsampling 2 * 2 => T_out = 32; audio_channels = 1
    assert out.shape == (B, cfg.audio_channels, T * 4), out.shape
    assert bool(jnp.all(jnp.isfinite(out)))
    print("KERNEL_OK")
</pallas_src>

<mosaic_0001>
module attributes {stable_mosaic.version = 11 : i64} {
  func.func @_conv_mm_kernel(%arg0: i32, %arg1: memref<224x128xbf16, #tpu.memory_space<vmem>>, %arg2: memref<32x224xbf16, #tpu.memory_space<vmem>>, %arg3: memref<32x1xf32, #tpu.memory_space<vmem>>, %arg4: memref<32x128xf32, #tpu.memory_space<vmem>>) attributes {dimension_semantics = [#tpu.dimension_semantics<parallel>], iteration_bounds = array<i64: 1>, scalar_prefetch = 0 : i64, scratch_operands = 0 : i64, tpu.core_type = #tpu.core_type<tc>, window_params = [{transform_indices = @transform_0, window_bounds = array<i64: 224, 128>}, {pipeline_mode = #tpu.pipeline_mode<synchronous>, transform_indices = @transform_1, window_bounds = array<i64: 32, 224>}, {pipeline_mode = #tpu.pipeline_mode<synchronous>, transform_indices = @transform_2, window_bounds = array<i64: 32, 1>}, {transform_indices = @transform_3, window_bounds = array<i64: 32, 128>}]} {
    %c0 = arith.constant 0 : index
    %c0_0 = arith.constant 0 : index
    %0 = vector.load %arg1[%c0, %c0_0] : memref<224x128xbf16, #tpu.memory_space<vmem>>, vector<224x128xbf16>
    %c0_1 = arith.constant 0 : index
    %c0_2 = arith.constant 0 : index
    %1 = vector.load %arg2[%c0_1, %c0_2] : memref<32x224xbf16, #tpu.memory_space<vmem>>, vector<32x224xbf16>
    %cst = arith.constant dense<0.000000e+00> : vector<32x128xf32>
    %2 = tpu.matmul %1, %0, %cst {dimension_numbers = #tpu.dot_dimension_numbers<[1], [0], [0], [1], [0, 0, 1, 1], [], []>} : vector<32x224xbf16>, vector<224x128xbf16>, vector<32x128xf32> -> vector<32x128xf32>
    %c0_3 = arith.constant 0 : index
    %c0_4 = arith.constant 0 : index
    %3 = vector.load %arg3[%c0_3, %c0_4] : memref<32x1xf32, #tpu.memory_space<vmem>>, vector<32x1xf32>
    %4 = vector.broadcast %3 : vector<32x1xf32> to vector<32x128xf32>
    %5 = arith.addf %2, %4 : vector<32x128xf32>
    %c0_5 = arith.constant 0 : index
    %c0_6 = arith.constant 0 : index
    %6 = vector.load %arg4[%c0_5, %c0_6] : memref<32x128xf32, #tpu.memory_space<vmem>>, vector<32x128xf32>
    tpu.vector_store %arg4[%c0_5, %c0_6], %5 {strides = array<i32>} : memref<32x128xf32, #tpu.memory_space<vmem>>, vector<32x128xf32>,
    return
  }
  func.func @transform_0(%arg0: i32) -> (i32, i32) {
    %c0_i32 = arith.constant 0 : i32
    %c0_i32_0 = arith.constant 0 : i32
    return %c0_i32, %arg0 : i32, i32
  }
  func.func @transform_1(%arg0: i32) -> (i32, i32) {
    %c0_i32 = arith.constant 0 : i32
    %c0_i32_0 = arith.constant 0 : i32
    %c0_i32_1 = arith.constant 0 : i32
    return %c0_i32, %c0_i32_0 : i32, i32
  }
  func.func @transform_2(%arg0: i32) -> (i32, i32) {
    %c0_i32 = arith.constant 0 : i32
    %c0_i32_0 = arith.constant 0 : i32
    %c0_i32_1 = arith.constant 0 : i32
    return %c0_i32, %c0_i32_0 : i32, i32
  }
  func.func @transform_3(%arg0: i32) -> (i32, i32) {
    %c0_i32 = arith.constant 0 : i32
    %c0_i32_0 = arith.constant 0 : i32
    return %c0_i32, %arg0 : i32, i32
  }
}

module attributes {stable_mosaic.version = 11 : i64} {
  func.func @_conv_mm_kernel(%arg0: i32, %arg1: memref<32x128xbf16, #tpu.memory_space<vmem>>, %arg2: memref<128x32xbf16, #tpu.memory_space<vmem>>, %arg3: memref<128x1xf32, #tpu.memory_space<vmem>>, %arg4: memref<128x128xf32, #tpu.memory_space<vmem>>) attributes {dimension_semantics = [#tpu.dimension_semantics<parallel>], iteration_bounds = array<i64: 1>, scalar_prefetch = 0 : i64, scratch_operands = 0 : i64, tpu.core_type = #tpu.core_type<tc>, window_params = [{transform_indices = @transform_0, window_bounds = array<i64: 32, 128>}, {pipeline_mode = #tpu.pipeline_mode<synchronous>, transform_indices = @transform_1, window_bounds = array<i64: 128, 32>}, {pipeline_mode = #tpu.pipeline_mode<synchronous>, transform_indices = @transform_2, window_bounds = array<i64: 128, 1>}, {transform_indices = @transform_3, window_bounds = array<i64: 128, 128>}]} {
    %c0 = arith.constant 0 : index
    %c0_0 = arith.constant 0 : index
    %0 = vector.load %arg1[%c0, %c0_0] : memref<32x128xbf16, #tpu.memory_space<vmem>>, vector<32x128xbf16>
    %c0_1 = arith.constant 0 : index
    %c0_2 = arith.constant 0 : index
    %1 = vector.load %arg2[%c0_1, %c0_2] : memref<128x32xbf16, #tpu.memory_space<vmem>>, vector<128x32xbf16>
    %cst = arith.constant dense<0.000000e+00> : vector<128x128xf32>
    %2 = tpu.matmul %1, %0, %cst {dimension_numbers = #tpu.dot_dimension_numbers<[1], [0], [0], [1], [0, 0, 1, 1], [], []>} : vector<128x32xbf16>, vector<32x128xbf16>, vector<128x128xf32> -> vector<128x128xf32>
    %c0_3 = arith.constant 0 : index
    %c0_4 = arith.constant 0 : index
    %3 = vector.load %arg3[%c0_3, %c0_4] : memref<128x1xf32, #tpu.memory_space<vmem>>, vector<128x1xf32>
    %4 = vector.broadcast %3 : vector<128x1xf32> to vector<128x128xf32>
    %5 = arith.addf %2, %4 : vector<128x128xf32>
    %c0_5 = arith.constant 0 : index
    %c0_6 = arith.constant 0 : index
    %6 = vector.load %arg4[%c0_5, %c0_6] : memref<128x128xf32, #tpu.memory_space<vmem>>, vector<128x128xf32>
    tpu.vector_store %arg4[%c0_5, %c0_6], %5 {strides = array<i32>} : memref<128x128xf32, #tpu.memory_space<vmem>>, vector<128x128xf32>,
    return
  }
  func.func @transform_0(%arg0: i32) -> (i32, i32) {
    %c0_i32 = arith.constant 0 : i32
    %c0_i32_0 = arith.constant 0 : i32
    return %c0_i32, %arg0 : i32, i32
  }
  func.func @transform_1(%arg0: i32) -> (i32, i32) {
    %c0_i32 = arith.constant 0 : i32
    %c0_i32_0 = arith.constant 0 : i32
    %c0_i32_1 = arith.constant 0 : i32
    return %c0_i32, %c0_i32_0 : i32, i32
  }
  func.func @transform_2(%arg0: i32) -> (i32, i32) {
    %c0_i32 = arith.constant 0 : i32
    %c0_i32_0 = arith.constant 0 : i32
    %c0_i32_1 = arith.constant 0 : i32
    return %c0_i32, %c0_i32_0 : i32, i32
  }
  func.func @transform_3(%arg0: i32) -> (i32, i32) {
    %c0_i32 = arith.constant 0 : i32
    %c0_i32_0 = arith.constant 0 : i32
    return %c0_i32, %arg0 : i32, i32
  }
}

module attributes {stable_mosaic.version = 11 : i64} {
  func.func @kernel(%arg0: memref<8x2x128xf32, #tpu.memory_space<vmem>>, %arg1: memref<32x128xbf16, #tpu.memory_space<vmem>>, %arg2: memref<8x2x32xf32, #tpu.memory_space<vmem>>) attributes {dimension_semantics = [], scalar_prefetch = 0 : i64, scratch_operands = 0 : i64, tpu.core_type = #tpu.core_type<tc>} {
    %c0 = arith.constant 0 : index
    %c0_0 = arith.constant 0 : index
    %0 = vector.load %arg1[%c0, %c0_0] : memref<32x128xbf16, #tpu.memory_space<vmem>>, vector<32x128xbf16>
    %cst = arith.constant 0.000000e+00 : f32
    %1 = vector.broadcast %cst : f32 to vector<2x32xf32>
    %c0_i32 = arith.constant 0 : i32
    %c8_i32 = arith.constant 8 : i32
    %2 = arith.addi %c0_i32, %c8_i32 : i32
    %c1_i32 = arith.constant 1 : i32
    %3:2 = scf.for %arg3 = %c0_i32 to %2 step %c1_i32 iter_args(%arg4 = %1, %arg5 = %1) -> (vector<2x32xf32>, vector<2x32xf32>)  : i32 {
      %4 = arith.index_cast %arg3 : i32 to index
      %c0_2 = arith.constant 0 : index
      %c0_3 = arith.constant 0 : index
      %5 = vector.load %arg0[%4, %c0_2, %c0_3] : memref<8x2x128xf32, #tpu.memory_space<vmem>>, vector<1x2x128xf32>
      %6 = vector.shape_cast %5 : vector<1x2x128xf32> to vector<2x128xf32>
      %7 = arith.truncf %arg4 : vector<2x32xf32> to vector<2x32xbf16>
      %cst_4 = arith.constant dense<0.000000e+00> : vector<2x128xf32>
      %8 = tpu.matmul %7, %0, %cst_4 {dimension_numbers = #tpu.dot_dimension_numbers<[1], [0], [0], [1], [0, 0, 1, 1], [], []>} : vector<2x32xbf16>, vector<32x128xbf16>, vector<2x128xf32> -> vector<2x128xf32>
      %9 = arith.addf %6, %8 : vector<2x128xf32>
      %10 = vector.extract_strided_slice %9 {offsets = [0, 0], sizes = [2, 32], strides = [1, 1]} : vector<2x128xf32> to vector<2x32xf32>
      %11 = arith.negf %10 : vector<2x32xf32>
      %12 = math.exp %11 : vector<2x32xf32>
      %cst_5 = arith.constant 1.000000e+00 : f32
      %13 = vector.broadcast %cst_5 : f32 to vector<2x32xf32>
      %14 = arith.addf %13, %12 : vector<2x32xf32>
      %15 = arith.divf %13, %14 : vector<2x32xf32>
      %16 = vector.extract_strided_slice %9 {offsets = [0, 32], sizes = [2, 32], strides = [1, 1]} : vector<2x128xf32> to vector<2x32xf32>
      %17 = arith.negf %16 : vector<2x32xf32>
      %18 = math.exp %17 : vector<2x32xf32>
      %cst_6 = arith.constant 1.000000e+00 : f32
      %19 = vector.broadcast %cst_6 : f32 to vector<2x32xf32>
      %20 = arith.addf %19, %18 : vector<2x32xf32>
      %21 = arith.divf %19, %20 : vector<2x32xf32>
      %22 = vector.extract_strided_slice %9 {offsets = [0, 64], sizes = [2, 32], strides = [1, 1]} : vector<2x128xf32> to vector<2x32xf32>
      %23 = math.tanh %22 : vector<2x32xf32>
      %24 = vector.extract_strided_slice %9 {offsets = [0, 96], sizes = [2, 32], strides = [1, 1]} : vector<2x128xf32> to vector<2x32xf32>
      %25 = arith.negf %24 : vector<2x32xf32>
      %26 = math.exp %25 : vector<2x32xf32>
      %cst_7 = arith.constant 1.000000e+00 : f32
      %27 = vector.broadcast %cst_7 : f32 to vector<2x32xf32>
      %28 = arith.addf %27, %26 : vector<2x32xf32>
      %29 = arith.divf %27, %28 : vector<2x32xf32>
      %30 = arith.mulf %21, %arg5 : vector<2x32xf32>
      %31 = arith.mulf %15, %23 : vector<2x32xf32>
      %32 = arith.addf %30, %31 : vector<2x32xf32>
      %33 = math.tanh %32 : vector<2x32xf32>
      %34 = arith.mulf %29, %33 : vector<2x32xf32>
      %35 = arith.index_cast %arg3 : i32 to index
      %c0_8 = arith.constant 0 : index
      %c0_9 = arith.constant 0 : index
      %36 = vector.load %arg2[%35, %c0_8, %c0_9] : memref<8x2x32xf32, #tpu.memory_space<vmem>>, vector<1x2x32xf32>
      %37 = vector.shape_cast %36 : vector<1x2x32xf32> to vector<2x32xf32>
      %38 = vector.shape_cast %34 : vector<2x32xf32> to vector<1x2x32xf32>
      tpu.vector_store %arg2[%35, %c0_8, %c0_9], %38 {strides = array<i32>} : memref<8x2x32xf32, #tpu.memory_space<vmem>>, vector<1x2x32xf32>,
      scf.yield %34, %32 : vector<2x32xf32>, vector<2x32xf32>
    }
    %c8_i32_1 = arith.constant 8 : i32
    return
  }
}

module attributes {stable_mosaic.version = 11 : i64} {
  func.func @kernel(%arg0: memref<8x2x128xf32, #tpu.memory_space<vmem>>, %arg1: memref<32x128xbf16, #tpu.memory_space<vmem>>, %arg2: memref<8x2x32xf32, #tpu.memory_space<vmem>>, %arg3: memref<8x2x32xf32, #tpu.memory_space<vmem>>) attributes {dimension_semantics = [], scalar_prefetch = 0 : i64, scratch_operands = 0 : i64, tpu.core_type = #tpu.core_type<tc>} {
    %c0 = arith.constant 0 : index
    %c0_0 = arith.constant 0 : index
    %0 = vector.load %arg1[%c0, %c0_0] : memref<32x128xbf16, #tpu.memory_space<vmem>>, vector<32x128xbf16>
    %cst = arith.constant 0.000000e+00 : f32
    %1 = vector.broadcast %cst : f32 to vector<2x32xf32>
    %c0_i32 = arith.constant 0 : i32
    %c8_i32 = arith.constant 8 : i32
    %2 = arith.addi %c0_i32, %c8_i32 : i32
    %c1_i32 = arith.constant 1 : i32
    %3:2 = scf.for %arg4 = %c0_i32 to %2 step %c1_i32 iter_args(%arg5 = %1, %arg6 = %1) -> (vector<2x32xf32>, vector<2x32xf32>)  : i32 {
      %4 = arith.index_cast %arg4 : i32 to index
      %c0_2 = arith.constant 0 : index
      %c0_3 = arith.constant 0 : index
      %5 = vector.load %arg0[%4, %c0_2, %c0_3] : memref<8x2x128xf32, #tpu.memory_space<vmem>>, vector<1x2x128xf32>
      %6 = vector.shape_cast %5 : vector<1x2x128xf32> to vector<2x128xf32>
      %7 = arith.truncf %arg5 : vector<2x32xf32> to vector<2x32xbf16>
      %cst_4 = arith.constant dense<0.000000e+00> : vector<2x128xf32>
      %8 = tpu.matmul %7, %0, %cst_4 {dimension_numbers = #tpu.dot_dimension_numbers<[1], [0], [0], [1], [0, 0, 1, 1], [], []>} : vector<2x32xbf16>, vector<32x128xbf16>, vector<2x128xf32> -> vector<2x128xf32>
      %9 = arith.addf %6, %8 : vector<2x128xf32>
      %10 = vector.extract_strided_slice %9 {offsets = [0, 0], sizes = [2, 32], strides = [1, 1]} : vector<2x128xf32> to vector<2x32xf32>
      %11 = arith.negf %10 : vector<2x32xf32>
      %12 = math.exp %11 : vector<2x32xf32>
      %cst_5 = arith.constant 1.000000e+00 : f32
      %13 = vector.broadcast %cst_5 : f32 to vector<2x32xf32>
      %14 = arith.addf %13, %12 : vector<2x32xf32>
      %15 = arith.divf %13, %14 : vector<2x32xf32>
      %16 = vector.extract_strided_slice %9 {offsets = [0, 32], sizes = [2, 32], strides = [1, 1]} : vector<2x128xf32> to vector<2x32xf32>
      %17 = arith.negf %16 : vector<2x32xf32>
      %18 = math.exp %17 : vector<2x32xf32>
      %cst_6 = arith.constant 1.000000e+00 : f32
      %19 = vector.broadcast %cst_6 : f32 to vector<2x32xf32>
      %20 = arith.addf %19, %18 : vector<2x32xf32>
      %21 = arith.divf %19, %20 : vector<2x32xf32>
      %22 = vector.extract_strided_slice %9 {offsets = [0, 64], sizes = [2, 32], strides = [1, 1]} : vector<2x128xf32> to vector<2x32xf32>
      %23 = math.tanh %22 : vector<2x32xf32>
      %24 = vector.extract_strided_slice %9 {offsets = [0, 96], sizes = [2, 32], strides = [1, 1]} : vector<2x128xf32> to vector<2x32xf32>
      %25 = arith.negf %24 : vector<2x32xf32>
      %26 = math.exp %25 : vector<2x32xf32>
      %cst_7 = arith.constant 1.000000e+00 : f32
      %27 = vector.broadcast %cst_7 : f32 to vector<2x32xf32>
      %28 = arith.addf %27, %26 : vector<2x32xf32>
      %29 = arith.divf %27, %28 : vector<2x32xf32>
      %30 = arith.mulf %21, %arg6 : vector<2x32xf32>
      %31 = arith.mulf %15, %23 : vector<2x32xf32>
      %32 = arith.addf %30, %31 : vector<2x32xf32>
      %33 = math.tanh %32 : vector<2x32xf32>
      %34 = arith.mulf %29, %33 : vector<2x32xf32>
      %35 = arith.index_cast %arg4 : i32 to index
      %c0_8 = arith.constant 0 : index
      %c0_9 = arith.constant 0 : index
      %36 = vector.load %arg2[%35, %c0_8, %c0_9] : memref<8x2x32xf32, #tpu.memory_space<vmem>>, vector<1x2x32xf32>
      %37 = vector.shape_cast %36 : vector<1x2x32xf32> to vector<2x32xf32>
      %38 = arith.addf %34, %37 : vector<2x32xf32>
      %39 = arith.index_cast %arg4 : i32 to index
      %c0_10 = arith.constant 0 : index
      %c0_11 = arith.constant 0 : index
      %40 = vector.load %arg3[%39, %c0_10, %c0_11] : memref<8x2x32xf32, #tpu.memory_space<vmem>>, vector<1x2x32xf32>
      %41 = vector.shape_cast %40 : vector<1x2x32xf32> to vector<2x32xf32>
      %42 = vector.shape_cast %38 : vector<2x32xf32> to vector<1x2x32xf32>
      tpu.vector_store %arg3[%39, %c0_10, %c0_11], %42 {strides = array<i32>} : memref<8x2x32xf32, #tpu.memory_space<vmem>>, vector<1x2x32xf32>,
      scf.yield %34, %32 : vector<2x32xf32>, vector<2x32xf32>
    }
    %c8_i32_1 = arith.constant 8 : i32
    return
  }
}

module attributes {stable_mosaic.version = 11 : i64} {
  func.func @_conv_mm_kernel(%arg0: i32, %arg1: memref<64x128xbf16, #tpu.memory_space<vmem>>, %arg2: memref<32x64xbf16, #tpu.memory_space<vmem>>, %arg3: memref<32x1xf32, #tpu.memory_space<vmem>>, %arg4: memref<32x128xf32, #tpu.memory_space<vmem>>) attributes {dimension_semantics = [#tpu.dimension_semantics<parallel>], iteration_bounds = array<i64: 1>, scalar_prefetch = 0 : i64, scratch_operands = 0 : i64, tpu.core_type = #tpu.core_type<tc>, window_params = [{transform_indices = @transform_0, window_bounds = array<i64: 64, 128>}, {pipeline_mode = #tpu.pipeline_mode<synchronous>, transform_indices = @transform_1, window_bounds = array<i64: 32, 64>}, {pipeline_mode = #tpu.pipeline_mode<synchronous>, transform_indices = @transform_2, window_bounds = array<i64: 32, 1>}, {transform_indices = @transform_3, window_bounds = array<i64: 32, 128>}]} {
    %c0 = arith.constant 0 : index
    %c0_0 = arith.constant 0 : index
    %0 = vector.load %arg1[%c0, %c0_0] : memref<64x128xbf16, #tpu.memory_space<vmem>>, vector<64x128xbf16>
    %1 = arith.extf %0 : vector<64x128xbf16> to vector<64x128xf32>
    %cst = arith.constant 0.000000e+00 : f32
    %2 = vector.broadcast %cst : f32 to vector<64x128xf32>
    %3 = arith.cmpf ogt, %1, %2 : vector<64x128xf32>
    %cst_1 = arith.constant 0.000000e+00 : f32
    %4 = vector.broadcast %cst_1 : f32 to vector<64x128xf32>
    %5 = arith.minimumf %1, %4 : vector<64x128xf32>
    %6 = math.exp %5 : vector<64x128xf32>
    %cst_2 = arith.constant 1.000000e+00 : f32
    %7 = vector.broadcast %cst_2 : f32 to vector<64x128xf32>
    %8 = arith.subf %6, %7 : vector<64x128xf32>
    %9 = arith.select %3, %1, %8 : vector<64x128xi1>, vector<64x128xf32>
    %10 = arith.truncf %9 : vector<64x128xf32> to vector<64x128xbf16>
    %c0_3 = arith.constant 0 : index
    %c0_4 = arith.constant 0 : index
    %11 = vector.load %arg2[%c0_3, %c0_4] : memref<32x64xbf16, #tpu.memory_space<vmem>>, vector<32x64xbf16>
    %cst_5 = arith.constant dense<0.000000e+00> : vector<32x128xf32>
    %12 = tpu.matmul %11, %10, %cst_5 {dimension_numbers = #tpu.dot_dimension_numbers<[1], [0], [0], [1], [0, 0, 1, 1], [], []>} : vector<32x64xbf16>, vector<64x128xbf16>, vector<32x128xf32> -> vector<32x128xf32>
    %c0_6 = arith.constant 0 : index
    %c0_7 = arith.constant 0 : index
    %13 = vector.load %arg3[%c0_6, %c0_7] : memref<32x1xf32, #tpu.memory_space<vmem>>, vector<32x1xf32>
    %14 = vector.broadcast %13 : vector<32x1xf32> to vector<32x128xf32>
    %15 = arith.addf %12, %14 : vector<32x128xf32>
    %c0_8 = arith.constant 0 : index
    %c0_9 = arith.constant 0 : index
    %16 = vector.load %arg4[%c0_8, %c0_9] : memref<32x128xf32, #tpu.memory_space<vmem>>, vector<32x128xf32>
    tpu.vector_store %arg4[%c0_8, %c0_9], %15 {strides = array<i32>} : memref<32x128xf32, #tpu.memory_space<vmem>>, vector<32x128xf32>,
    return
  }
  func.func @transform_0(%arg0: i32) -> (i32, i32) {
    %c0_i32 = arith.constant 0 : i32
    %c0_i32_0 = arith.constant 0 : i32
    return %c0_i32, %arg0 : i32, i32
  }
  func.func @transform_1(%arg0: i32) -> (i32, i32) {
    %c0_i32 = arith.constant 0 : i32
    %c0_i32_0 = arith.constant 0 : i32
    %c0_i32_1 = arith.constant 0 : i32
    return %c0_i32, %c0_i32_0 : i32, i32
  }
  func.func @transform_2(%arg0: i32) -> (i32, i32) {
    %c0_i32 = arith.constant 0 : i32
    %c0_i32_0 = arith.constant 0 : i32
    %c0_i32_1 = arith.constant 0 : i32
    return %c0_i32, %c0_i32_0 : i32, i32
  }
  func.func @transform_3(%arg0: i32) -> (i32, i32) {
    %c0_i32 = arith.constant 0 : i32
    %c0_i32_0 = arith.constant 0 : i32
    return %c0_i32, %arg0 : i32, i32
  }
}

module attributes {stable_mosaic.version = 11 : i64} {
  func.func @_conv_mm_kernel(%arg0: i32, %arg1: memref<48x128xbf16, #tpu.memory_space<vmem>>, %arg2: memref<8x48xbf16, #tpu.memory_space<vmem>>, %arg3: memref<8x1xf32, #tpu.memory_space<vmem>>, %arg4: memref<8x128xf32, #tpu.memory_space<vmem>>) attributes {dimension_semantics = [#tpu.dimension_semantics<parallel>], iteration_bounds = array<i64: 1>, scalar_prefetch = 0 : i64, scratch_operands = 0 : i64, tpu.core_type = #tpu.core_type<tc>, window_params = [{transform_indices = @transform_0, window_bounds = array<i64: 48, 128>}, {pipeline_mode = #tpu.pipeline_mode<synchronous>, transform_indices = @transform_1, window_bounds = array<i64: 8, 48>}, {pipeline_mode = #tpu.pipeline_mode<synchronous>, transform_indices = @transform_2, window_bounds = array<i64: 8, 1>}, {transform_indices = @transform_3, window_bounds = array<i64: 8, 128>}]} {
    %c0 = arith.constant 0 : index
    %c0_0 = arith.constant 0 : index
    %0 = vector.load %arg1[%c0, %c0_0] : memref<48x128xbf16, #tpu.memory_space<vmem>>, vector<48x128xbf16>
    %1 = arith.extf %0 : vector<48x128xbf16> to vector<48x128xf32>
    %cst = arith.constant 0.000000e+00 : f32
    %2 = vector.broadcast %cst : f32 to vector<48x128xf32>
    %3 = arith.cmpf ogt, %1, %2 : vector<48x128xf32>
    %cst_1 = arith.constant 0.000000e+00 : f32
    %4 = vector.broadcast %cst_1 : f32 to vector<48x128xf32>
    %5 = arith.minimumf %1, %4 : vector<48x128xf32>
    %6 = math.exp %5 : vector<48x128xf32>
    %cst_2 = arith.constant 1.000000e+00 : f32
    %7 = vector.broadcast %cst_2 : f32 to vector<48x128xf32>
    %8 = arith.subf %6, %7 : vector<48x128xf32>
    %9 = arith.select %3, %1, %8 : vector<48x128xi1>, vector<48x128xf32>
    %10 = arith.truncf %9 : vector<48x128xf32> to vector<48x128xbf16>
    %c0_3 = arith.constant 0 : index
    %c0_4 = arith.constant 0 : index
    %11 = vector.load %arg2[%c0_3, %c0_4] : memref<8x48xbf16, #tpu.memory_space<vmem>>, vector<8x48xbf16>
    %cst_5 = arith.constant dense<0.000000e+00> : vector<8x128xf32>
    %12 = tpu.matmul %11, %10, %cst_5 {dimension_numbers = #tpu.dot_dimension_numbers<[1], [0], [0], [1], [0, 0, 1, 1], [], []>} : vector<8x48xbf16>, vector<48x128xbf16>, vector<8x128xf32> -> vector<8x128xf32>
    %c0_6 = arith.constant 0 : index
    %c0_7 = arith.constant 0 : index
    %13 = vector.load %arg3[%c0_6, %c0_7] : memref<8x1xf32, #tpu.memory_space<vmem>>, vector<8x1xf32>
    %14 = vector.broadcast %13 : vector<8x1xf32> to vector<8x128xf32>
    %15 = arith.addf %12, %14 : vector<8x128xf32>
    %c0_8 = arith.constant 0 : index
    %c0_9 = arith.constant 0 : index
    %16 = vector.load %arg4[%c0_8, %c0_9] : memref<8x128xf32, #tpu.memory_space<vmem>>, vector<8x128xf32>
    tpu.vector_store %arg4[%c0_8, %c0_9], %15 {strides = array<i32>} : memref<8x128xf32, #tpu.memory_space<vmem>>, vector<8x128xf32>,
    return
  }
  func.func @transform_0(%arg0: i32) -> (i32, i32) {
    %c0_i32 = arith.constant 0 : i32
    %c0_i32_0 = arith.constant 0 : i32
    return %c0_i32, %arg0 : i32, i32
  }
  func.func @transform_1(%arg0: i32) -> (i32, i32) {
    %c0_i32 = arith.constant 0 : i32
    %c0_i32_0 = arith.constant 0 : i32
    %c0_i32_1 = arith.constant 0 : i32
    return %c0_i32, %c0_i32_0 : i32, i32
  }
  func.func @transform_2(%arg0: i32) -> (i32, i32) {
    %c0_i32 = arith.constant 0 : i32
    %c0_i32_0 = arith.constant 0 : i32
    %c0_i32_1 = arith.constant 0 : i32
    return %c0_i32, %c0_i32_0 : i32, i32
  }
  func.func @transform_3(%arg0: i32) -> (i32, i32) {
    %c0_i32 = arith.constant 0 : i32
    %c0_i32_0 = arith.constant 0 : i32
    return %c0_i32, %arg0 : i32, i32
  }
}

module attributes {stable_mosaic.version = 11 : i64} {
  func.func @_conv_mm_kernel(%arg0: i32, %arg1: memref<16x128xbf16, #tpu.memory_space<vmem>>, %arg2: memref<16x16xbf16, #tpu.memory_space<vmem>>, %arg3: memref<16x1xf32, #tpu.memory_space<vmem>>, %arg4: memref<16x128xf32, #tpu.memory_space<vmem>>) attributes {dimension_semantics = [#tpu.dimension_semantics<parallel>], iteration_bounds = array<i64: 1>, scalar_prefetch = 0 : i64, scratch_operands = 0 : i64, tpu.core_type = #tpu.core_type<tc>, window_params = [{transform_indices = @transform_0, window_bounds = array<i64: 16, 128>}, {pipeline_mode = #tpu.pipeline_mode<synchronous>, transform_indices = @transform_1, window_bounds = array<i64: 16, 16>}, {pipeline_mode = #tpu.pipeline_mode<synchronous>, transform_indices = @transform_2, window_bounds = array<i64: 16, 1>}, {transform_indices = @transform_3, window_bounds = array<i64: 16, 128>}]} {
    %c0 = arith.constant 0 : index
    %c0_0 = arith.constant 0 : index
    %0 = vector.load %arg1[%c0, %c0_0] : memref<16x128xbf16, #tpu.memory_space<vmem>>, vector<16x128xbf16>
    %c0_1 = arith.constant 0 : index
    %c0_2 = arith.constant 0 : index
    %1 = vector.load %arg2[%c0_1, %c0_2] : memref<16x16xbf16, #tpu.memory_space<vmem>>, vector<16x16xbf16>
    %cst = arith.constant dense<0.000000e+00> : vector<16x128xf32>
    %2 = tpu.matmul %1, %0, %cst {dimension_numbers = #tpu.dot_dimension_numbers<[1], [0], [0], [1], [0, 0, 1, 1], [], []>} : vector<16x16xbf16>, vector<16x128xbf16>, vector<16x128xf32> -> vector<16x128xf32>
    %c0_3 = arith.constant 0 : index
    %c0_4 = arith.constant 0 : index
    %3 = vector.load %arg3[%c0_3, %c0_4] : memref<16x1xf32, #tpu.memory_space<vmem>>, vector<16x1xf32>
    %4 = vector.broadcast %3 : vector<16x1xf32> to vector<16x128xf32>
    %5 = arith.addf %2, %4 : vector<16x128xf32>
    %c0_5 = arith.constant 0 : index
    %c0_6 = arith.constant 0 : index
    %6 = vector.load %arg4[%c0_5, %c0_6] : memref<16x128xf32, #tpu.memory_space<vmem>>, vector<16x128xf32>
    tpu.vector_store %arg4[%c0_5, %c0_6], %5 {strides = array<i32>} : memref<16x128xf32, #tpu.memory_space<vmem>>, vector<16x128xf32>,
    return
  }
  func.func @transform_0(%arg0: i32) -> (i32, i32) {
    %c0_i32 = arith.constant 0 : i32
    %c0_i32_0 = arith.constant 0 : i32
    return %c0_i32, %arg0 : i32, i32
  }
  func.func @transform_1(%arg0: i32) -> (i32, i32) {
    %c0_i32 = arith.constant 0 : i32
    %c0_i32_0 = arith.constant 0 : i32
    %c0_i32_1 = arith.constant 0 : i32
    return %c0_i32, %c0_i32_0 : i32, i32
  }
  func.func @transform_2(%arg0: i32) -> (i32, i32) {
    %c0_i32 = arith.constant 0 : i32
    %c0_i32_0 = arith.constant 0 : i32
    %c0_i32_1 = arith.constant 0 : i32
    return %c0_i32, %c0_i32_0 : i32, i32
  }
  func.func @transform_3(%arg0: i32) -> (i32, i32) {
    %c0_i32 = arith.constant 0 : i32
    %c0_i32_0 = arith.constant 0 : i32
    return %c0_i32, %arg0 : i32, i32
  }
}

module attributes {stable_mosaic.version = 11 : i64} {
  func.func @_conv_mm_kernel(%arg0: i32, %arg1: memref<8x128xbf16, #tpu.memory_space<vmem>>, %arg2: memref<16x8xbf16, #tpu.memory_space<vmem>>, %arg3: memref<16x1xf32, #tpu.memory_space<vmem>>, %arg4: memref<16x128xf32, #tpu.memory_space<vmem>>, %arg5: memref<16x128xf32, #tpu.memory_space<vmem>>) attributes {dimension_semantics = [#tpu.dimension_semantics<parallel>], iteration_bounds = array<i64: 1>, scalar_prefetch = 0 : i64, scratch_operands = 0 : i64, tpu.core_type = #tpu.core_type<tc>, window_params = [{transform_indices = @transform_0, window_bounds = array<i64: 8, 128>}, {pipeline_mode = #tpu.pipeline_mode<synchronous>, transform_indices = @transform_1, window_bounds = array<i64: 16, 8>}, {pipeline_mode = #tpu.pipeline_mode<synchronous>, transform_indices = @transform_2, window_bounds = array<i64: 16, 1>}, {transform_indices = @transform_3, window_bounds = array<i64: 16, 128>}, {transform_indices = @transform_4, window_bounds = array<i64: 16, 128>}]} {
    %c0 = arith.constant 0 : index
    %c0_0 = arith.constant 0 : index
    %0 = vector.load %arg1[%c0, %c0_0] : memref<8x128xbf16, #tpu.memory_space<vmem>>, vector<8x128xbf16>
    %1 = arith.extf %0 : vector<8x128xbf16> to vector<8x128xf32>
    %cst = arith.constant 0.000000e+00 : f32
    %2 = vector.broadcast %cst : f32 to vector<8x128xf32>
    %3 = arith.cmpf ogt, %1, %2 : vector<8x128xf32>
    %cst_1 = arith.constant 0.000000e+00 : f32
    %4 = vector.broadcast %cst_1 : f32 to vector<8x128xf32>
    %5 = arith.minimumf %1, %4 : vector<8x128xf32>
    %6 = math.exp %5 : vector<8x128xf32>
    %cst_2 = arith.constant 1.000000e+00 : f32
    %7 = vector.broadcast %cst_2 : f32 to vector<8x128xf32>
    %8 = arith.subf %6, %7 : vector<8x128xf32>
    %9 = arith.select %3, %1, %8 : vector<8x128xi1>, vector<8x128xf32>
    %10 = arith.truncf %9 : vector<8x128xf32> to vector<8x128xbf16>
    %c0_3 = arith.constant 0 : index
    %c0_4 = arith.constant 0 : index
    %11 = vector.load %arg2[%c0_3, %c0_4] : memref<16x8xbf16, #tpu.memory_space<vmem>>, vector<16x8xbf16>
    %cst_5 = arith.constant dense<0.000000e+00> : vector<16x128xf32>
    %12 = tpu.matmul %11, %10, %cst_5 {dimension_numbers = #tpu.dot_dimension_numbers<[1], [0], [0], [1], [0, 0, 1, 1], [], []>} : vector<16x8xbf16>, vector<8x128xbf16>, vector<16x128xf32> -> vector<16x128xf32>
    %c0_6 = arith.constant 0 : index
    %c0_7 = arith.constant 0 : index
    %13 = vector.load %arg3[%c0_6, %c0_7] : memref<16x1xf32, #tpu.memory_space<vmem>>, vector<16x1xf32>
    %14 = vector.broadcast %13 : vector<16x1xf32> to vector<16x128xf32>
    %15 = arith.addf %12, %14 : vector<16x128xf32>
    %c0_8 = arith.constant 0 : index
    %c0_9 = arith.constant 0 : index
    %16 = vector.load %arg4[%c0_8, %c0_9] : memref<16x128xf32, #tpu.memory_space<vmem>>, vector<16x128xf32>
    %17 = arith.addf %15, %16 : vector<16x128xf32>
    %c0_10 = arith.constant 0 : index
    %c0_11 = arith.constant 0 : index
    %18 = vector.load %arg5[%c0_10, %c0_11] : memref<16x128xf32, #tpu.memory_space<vmem>>, vector<16x128xf32>
    tpu.vector_store %arg5[%c0_10, %c0_11], %17 {strides = array<i32>} : memref<16x128xf32, #tpu.memory_space<vmem>>, vector<16x128xf32>,
    return
  }
  func.func @transform_0(%arg0: i32) -> (i32, i32) {
    %c0_i32 = arith.constant 0 : i32
    %c0_i32_0 = arith.constant 0 : i32
    return %c0_i32, %arg0 : i32, i32
  }
  func.func @transform_1(%arg0: i32) -> (i32, i32) {
    %c0_i32 = arith.constant 0 : i32
    %c0_i32_0 = arith.constant 0 : i32
    %c0_i32_1 = arith.constant 0 : i32
    return %c0_i32, %c0_i32_0 : i32, i32
  }
  func.func @transform_2(%arg0: i32) -> (i32, i32) {
    %c0_i32 = arith.constant 0 : i32
    %c0_i32_0 = arith.constant 0 : i32
    %c0_i32_1 = arith.constant 0 : i32
    return %c0_i32, %c0_i32_0 : i32, i32
  }
  func.func @transform_3(%arg0: i32) -> (i32, i32) {
    %c0_i32 = arith.constant 0 : i32
    %c0_i32_0 = arith.constant 0 : i32
    return %c0_i32, %arg0 : i32, i32
  }
  func.func @transform_4(%arg0: i32) -> (i32, i32) {
    %c0_i32 = arith.constant 0 : i32
    %c0_i32_0 = arith.constant 0 : i32
    return %c0_i32, %arg0 : i32, i32
  }
}

module attributes {stable_mosaic.version = 11 : i64} {
  func.func @_conv_mm_kernel(%arg0: i32, %arg1: memref<32x128xbf16, #tpu.memory_space<vmem>>, %arg2: memref<16x32xbf16, #tpu.memory_space<vmem>>, %arg3: memref<16x1xf32, #tpu.memory_space<vmem>>, %arg4: memref<16x128xf32, #tpu.memory_space<vmem>>) attributes {dimension_semantics = [#tpu.dimension_semantics<parallel>], iteration_bounds = array<i64: 1>, scalar_prefetch = 0 : i64, scratch_operands = 0 : i64, tpu.core_type = #tpu.core_type<tc>, window_params = [{transform_indices = @transform_0, window_bounds = array<i64: 32, 128>}, {pipeline_mode = #tpu.pipeline_mode<synchronous>, transform_indices = @transform_1, window_bounds = array<i64: 16, 32>}, {pipeline_mode = #tpu.pipeline_mode<synchronous>, transform_indices = @transform_2, window_bounds = array<i64: 16, 1>}, {transform_indices = @transform_3, window_bounds = array<i64: 16, 128>}]} {
    %c0 = arith.constant 0 : index
    %c0_0 = arith.constant 0 : index
    %0 = vector.load %arg1[%c0, %c0_0] : memref<32x128xbf16, #tpu.memory_space<vmem>>, vector<32x128xbf16>
    %1 = arith.extf %0 : vector<32x128xbf16> to vector<32x128xf32>
    %cst = arith.constant 0.000000e+00 : f32
    %2 = vector.broadcast %cst : f32 to vector<32x128xf32>
    %3 = arith.cmpf ogt, %1, %2 : vector<32x128xf32>
    %cst_1 = arith.constant 0.000000e+00 : f32
    %4 = vector.broadcast %cst_1 : f32 to vector<32x128xf32>
    %5 = arith.minimumf %1, %4 : vector<32x128xf32>
    %6 = math.exp %5 : vector<32x128xf32>
    %cst_2 = arith.constant 1.000000e+00 : f32
    %7 = vector.broadcast %cst_2 : f32 to vector<32x128xf32>
    %8 = arith.subf %6, %7 : vector<32x128xf32>
    %9 = arith.select %3, %1, %8 : vector<32x128xi1>, vector<32x128xf32>
    %10 = arith.truncf %9 : vector<32x128xf32> to vector<32x128xbf16>
    %c0_3 = arith.constant 0 : index
    %c0_4 = arith.constant 0 : index
    %11 = vector.load %arg2[%c0_3, %c0_4] : memref<16x32xbf16, #tpu.memory_space<vmem>>, vector<16x32xbf16>
    %cst_5 = arith.constant dense<0.000000e+00> : vector<16x128xf32>
    %12 = tpu.matmul %11, %10, %cst_5 {dimension_numbers = #tpu.dot_dimension_numbers<[1], [0], [0], [1], [0, 0, 1, 1], [], []>} : vector<16x32xbf16>, vector<32x128xbf16>, vector<16x128xf32> -> vector<16x128xf32>
    %c0_6 = arith.constant 0 : index
    %c0_7 = arith.constant 0 : index
    %13 = vector.load %arg3[%c0_6, %c0_7] : memref<16x1xf32, #tpu.memory_space<vmem>>, vector<16x1xf32>
    %14 = vector.broadcast %13 : vector<16x1xf32> to vector<16x128xf32>
    %15 = arith.addf %12, %14 : vector<16x128xf32>
    %c0_8 = arith.constant 0 : index
    %c0_9 = arith.constant 0 : index
    %16 = vector.load %arg4[%c0_8, %c0_9] : memref<16x128xf32, #tpu.memory_space<vmem>>, vector<16x128xf32>
    tpu.vector_store %arg4[%c0_8, %c0_9], %15 {strides = array<i32>} : memref<16x128xf32, #tpu.memory_space<vmem>>, vector<16x128xf32>,
    return
  }
  func.func @transform_0(%arg0: i32) -> (i32, i32) {
    %c0_i32 = arith.constant 0 : i32
    %c0_i32_0 = arith.constant 0 : i32
    return %c0_i32, %arg0 : i32, i32
  }
  func.func @transform_1(%arg0: i32) -> (i32, i32) {
    %c0_i32 = arith.constant 0 : i32
    %c0_i32_0 = arith.constant 0 : i32
    %c0_i32_1 = arith.constant 0 : i32
    return %c0_i32, %c0_i32_0 : i32, i32
  }
  func.func @transform_2(%arg0: i32) -> (i32, i32) {
    %c0_i32 = arith.constant 0 : i32
    %c0_i32_0 = arith.constant 0 : i32
    %c0_i32_1 = arith.constant 0 : i32
    return %c0_i32, %c0_i32_0 : i32, i32
  }
  func.func @transform_3(%arg0: i32) -> (i32, i32) {
    %c0_i32 = arith.constant 0 : i32
    %c0_i32_0 = arith.constant 0 : i32
    return %c0_i32, %arg0 : i32, i32
  }
}

module attributes {stable_mosaic.version = 11 : i64} {
  func.func @_conv_mm_kernel(%arg0: i32, %arg1: memref<24x128xbf16, #tpu.memory_space<vmem>>, %arg2: memref<8x24xbf16, #tpu.memory_space<vmem>>, %arg3: memref<8x1xf32, #tpu.memory_space<vmem>>, %arg4: memref<8x128xf32, #tpu.memory_space<vmem>>) attributes {dimension_semantics = [#tpu.dimension_semantics<parallel>], iteration_bounds = array<i64: 1>, scalar_prefetch = 0 : i64, scratch_operands = 0 : i64, tpu.core_type = #tpu.core_type<tc>, window_params = [{transform_indices = @transform_0, window_bounds = array<i64: 24, 128>}, {pipeline_mode = #tpu.pipeline_mode<synchronous>, transform_indices = @transform_1, window_bounds = array<i64: 8, 24>}, {pipeline_mode = #tpu.pipeline_mode<synchronous>, transform_indices = @transform_2, window_bounds = array<i64: 8, 1>}, {transform_indices = @transform_3, window_bounds = array<i64: 8, 128>}]} {
    %c0 = arith.constant 0 : index
    %c0_0 = arith.constant 0 : index
    %0 = vector.load %arg1[%c0, %c0_0] : memref<24x128xbf16, #tpu.memory_space<vmem>>, vector<24x128xbf16>
    %1 = arith.extf %0 : vector<24x128xbf16> to vector<24x128xf32>
    %cst = arith.constant 0.000000e+00 : f32
    %2 = vector.broadcast %cst : f32 to vector<24x128xf32>
    %3 = arith.cmpf ogt, %1, %2 : vector<24x128xf32>
    %cst_1 = arith.constant 0.000000e+00 : f32
    %4 = vector.broadcast %cst_1 : f32 to vector<24x128xf32>
    %5 = arith.minimumf %1, %4 : vector<24x128xf32>
    %6 = math.exp %5 : vector<24x128xf32>
    %cst_2 = arith.constant 1.000000e+00 : f32
    %7 = vector.broadcast %cst_2 : f32 to vector<24x128xf32>
    %8 = arith.subf %6, %7 : vector<24x128xf32>
    %9 = arith.select %3, %1, %8 : vector<24x128xi1>, vector<24x128xf32>
    %10 = arith.truncf %9 : vector<24x128xf32> to vector<24x128xbf16>
    %c0_3 = arith.constant 0 : index
    %c0_4 = arith.constant 0 : index
    %11 = vector.load %arg2[%c0_3, %c0_4] : memref<8x24xbf16, #tpu.memory_space<vmem>>, vector<8x24xbf16>
    %cst_5 = arith.constant dense<0.000000e+00> : vector<8x128xf32>
    %12 = tpu.matmul %11, %10, %cst_5 {dimension_numbers = #tpu.dot_dimension_numbers<[1], [0], [0], [1], [0, 0, 1, 1], [], []>} : vector<8x24xbf16>, vector<24x128xbf16>, vector<8x128xf32> -> vector<8x128xf32>
    %c0_6 = arith.constant 0 : index
    %c0_7 = arith.constant 0 : index
    %13 = vector.load %arg3[%c0_6, %c0_7] : memref<8x1xf32, #tpu.memory_space<vmem>>, vector<8x1xf32>
    %14 = vector.broadcast %13 : vector<8x1xf32> to vector<8x128xf32>
    %15 = arith.addf %12, %14 : vector<8x128xf32>
    %c0_8 = arith.constant 0 : index
    %c0_9 = arith.constant 0 : index
    %16 = vector.load %arg4[%c0_8, %c0_9] : memref<8x128xf32, #tpu.memory_space<vmem>>, vector<8x128xf32>
    tpu.vector_store %arg4[%c0_8, %c0_9], %15 {strides = array<i32>} : memref<8x128xf32, #tpu.memory_space<vmem>>, vector<8x128xf32>,
    return
  }
  func.func @transform_0(%arg0: i32) -> (i32, i32) {
    %c0_i32 = arith.constant 0 : i32
    %c0_i32_0 = arith.constant 0 : i32
    return %c0_i32, %arg0 : i32, i32
  }
  func.func @transform_1(%arg0: i32) -> (i32, i32) {
    %c0_i32 = arith.constant 0 : i32
    %c0_i32_0 = arith.constant 0 : i32
    %c0_i32_1 = arith.constant 0 : i32
    return %c0_i32, %c0_i32_0 : i32, i32
  }
  func.func @transform_2(%arg0: i32) -> (i32, i32) {
    %c0_i32 = arith.constant 0 : i32
    %c0_i32_0 = arith.constant 0 : i32
    %c0_i32_1 = arith.constant 0 : i32
    return %c0_i32, %c0_i32_0 : i32, i32
  }
  func.func @transform_3(%arg0: i32) -> (i32, i32) {
    %c0_i32 = arith.constant 0 : i32
    %c0_i32_0 = arith.constant 0 : i32
    return %c0_i32, %arg0 : i32, i32
  }
}

module attributes {stable_mosaic.version = 11 : i64} {
  func.func @_conv_mm_kernel(%arg0: i32, %arg1: memref<8x128xbf16, #tpu.memory_space<vmem>>, %arg2: memref<8x8xbf16, #tpu.memory_space<vmem>>, %arg3: memref<8x1xf32, #tpu.memory_space<vmem>>, %arg4: memref<8x128xf32, #tpu.memory_space<vmem>>) attributes {dimension_semantics = [#tpu.dimension_semantics<parallel>], iteration_bounds = array<i64: 1>, scalar_prefetch = 0 : i64, scratch_operands = 0 : i64, tpu.core_type = #tpu.core_type<tc>, window_params = [{transform_indices = @transform_0, window_bounds = array<i64: 8, 128>}, {pipeline_mode = #tpu.pipeline_mode<synchronous>, transform_indices = @transform_1, window_bounds = array<i64: 8, 8>}, {pipeline_mode = #tpu.pipeline_mode<synchronous>, transform_indices = @transform_2, window_bounds = array<i64: 8, 1>}, {transform_indices = @transform_3, window_bounds = array<i64: 8, 128>}]} {
    %c0 = arith.constant 0 : index
    %c0_0 = arith.constant 0 : index
    %0 = vector.load %arg1[%c0, %c0_0] : memref<8x128xbf16, #tpu.memory_space<vmem>>, vector<8x128xbf16>
    %c0_1 = arith.constant 0 : index
    %c0_2 = arith.constant 0 : index
    %1 = vector.load %arg2[%c0_1, %c0_2] : memref<8x8xbf16, #tpu.memory_space<vmem>>, vector<8x8xbf16>
    %cst = arith.constant dense<0.000000e+00> : vector<8x128xf32>
    %2 = tpu.matmul %1, %0, %cst {dimension_numbers = #tpu.dot_dimension_numbers<[1], [0], [0], [1], [0, 0, 1, 1], [], []>} : vector<8x8xbf16>, vector<8x128xbf16>, vector<8x128xf32> -> vector<8x128xf32>
    %c0_3 = arith.constant 0 : index
    %c0_4 = arith.constant 0 : index
    %3 = vector.load %arg3[%c0_3, %c0_4] : memref<8x1xf32, #tpu.memory_space<vmem>>, vector<8x1xf32>
    %4 = vector.broadcast %3 : vector<8x1xf32> to vector<8x128xf32>
    %5 = arith.addf %2, %4 : vector<8x128xf32>
    %c0_5 = arith.constant 0 : index
    %c0_6 = arith.constant 0 : index
    %6 = vector.load %arg4[%c0_5, %c0_6] : memref<8x128xf32, #tpu.memory_space<vmem>>, vector<8x128xf32>
    tpu.vector_store %arg4[%c0_5, %c0_6], %5 {strides = array<i32>} : memref<8x128xf32, #tpu.memory_space<vmem>>, vector<8x128xf32>,
    return
  }
  func.func @transform_0(%arg0: i32) -> (i32, i32) {
    %c0_i32 = arith.constant 0 : i32
    %c0_i32_0 = arith.constant 0 : i32
    return %c0_i32, %arg0 : i32, i32
  }
  func.func @transform_1(%arg0: i32) -> (i32, i32) {
    %c0_i32 = arith.constant 0 : i32
    %c0_i32_0 = arith.constant 0 : i32
    %c0_i32_1 = arith.constant 0 : i32
    return %c0_i32, %c0_i32_0 : i32, i32
  }
  func.func @transform_2(%arg0: i32) -> (i32, i32) {
    %c0_i32 = arith.constant 0 : i32
    %c0_i32_0 = arith.constant 0 : i32
    %c0_i32_1 = arith.constant 0 : i32
    return %c0_i32, %c0_i32_0 : i32, i32
  }
  func.func @transform_3(%arg0: i32) -> (i32, i32) {
    %c0_i32 = arith.constant 0 : i32
    %c0_i32_0 = arith.constant 0 : i32
    return %c0_i32, %arg0 : i32, i32
  }
}

module attributes {stable_mosaic.version = 11 : i64} {
  func.func @_conv_mm_kernel(%arg0: i32, %arg1: memref<8x128xbf16, #tpu.memory_space<vmem>>, %arg2: memref<8x8xbf16, #tpu.memory_space<vmem>>, %arg3: memref<8x1xf32, #tpu.memory_space<vmem>>, %arg4: memref<8x128xf32, #tpu.memory_space<vmem>>, %arg5: memref<8x128xf32, #tpu.memory_space<vmem>>) attributes {dimension_semantics = [#tpu.dimension_semantics<parallel>], iteration_bounds = array<i64: 1>, scalar_prefetch = 0 : i64, scratch_operands = 0 : i64, tpu.core_type = #tpu.core_type<tc>, window_params = [{transform_indices = @transform_0, window_bounds = array<i64: 8, 128>}, {pipeline_mode = #tpu.pipeline_mode<synchronous>, transform_indices = @transform_1, window_bounds = array<i64: 8, 8>}, {pipeline_mode = #tpu.pipeline_mode<synchronous>, transform_indices = @transform_2, window_bounds = array<i64: 8, 1>}, {transform_indices = @transform_3, window_bounds = array<i64: 8, 128>}, {transform_indices = @transform_4, window_bounds = array<i64: 8, 128>}]} {
    %c0 = arith.constant 0 : index
    %c0_0 = arith.constant 0 : index
    %0 = vector.load %arg1[%c0, %c0_0] : memref<8x128xbf16, #tpu.memory_space<vmem>>, vector<8x128xbf16>
    %1 = arith.extf %0 : vector<8x128xbf16> to vector<8x128xf32>
    %cst = arith.constant 0.000000e+00 : f32
    %2 = vector.broadcast %cst : f32 to vector<8x128xf32>
    %3 = arith.cmpf ogt, %1, %2 : vector<8x128xf32>
    %cst_1 = arith.constant 0.000000e+00 : f32
    %4 = vector.broadcast %cst_1 : f32 to vector<8x128xf32>
    %5 = arith.minimumf %1, %4 : vector<8x128xf32>
    %6 = math.exp %5 : vector<8x128xf32>
    %cst_2 = arith.constant 1.000000e+00 : f32
    %7 = vector.broadcast %cst_2 : f32 to vector<8x128xf32>
    %8 = arith.subf %6, %7 : vector<8x128xf32>
    %9 = arith.select %3, %1, %8 : vector<8x128xi1>, vector<8x128xf32>
    %10 = arith.truncf %9 : vector<8x128xf32> to vector<8x128xbf16>
    %c0_3 = arith.constant 0 : index
    %c0_4 = arith.constant 0 : index
    %11 = vector.load %arg2[%c0_3, %c0_4] : memref<8x8xbf16, #tpu.memory_space<vmem>>, vector<8x8xbf16>
    %cst_5 = arith.constant dense<0.000000e+00> : vector<8x128xf32>
    %12 = tpu.matmul %11, %10, %cst_5 {dimension_numbers = #tpu.dot_dimension_numbers<[1], [0], [0], [1], [0, 0, 1, 1], [], []>} : vector<8x8xbf16>, vector<8x128xbf16>, vector<8x128xf32> -> vector<8x128xf32>
    %c0_6 = arith.constant 0 : index
    %c0_7 = arith.constant 0 : index
    %13 = vector.load %arg3[%c0_6, %c0_7] : memref<8x1xf32, #tpu.memory_space<vmem>>, vector<8x1xf32>
    %14 = vector.broadcast %13 : vector<8x1xf32> to vector<8x128xf32>
    %15 = arith.addf %12, %14 : vector<8x128xf32>
    %c0_8 = arith.constant 0 : index
    %c0_9 = arith.constant 0 : index
    %16 = vector.load %arg4[%c0_8, %c0_9] : memref<8x128xf32, #tpu.memory_space<vmem>>, vector<8x128xf32>
    %17 = arith.addf %15, %16 : vector<8x128xf32>
    %c0_10 = arith.constant 0 : index
    %c0_11 = arith.constant 0 : index
    %18 = vector.load %arg5[%c0_10, %c0_11] : memref<8x128xf32, #tpu.memory_space<vmem>>, vector<8x128xf32>
    tpu.vector_store %arg5[%c0_10, %c0_11], %17 {strides = array<i32>} : memref<8x128xf32, #tpu.memory_space<vmem>>, vector<8x128xf32>,
    return
  }
  func.func @transform_0(%arg0: i32) -> (i32, i32) {
    %c0_i32 = arith.constant 0 : i32
    %c0_i32_0 = arith.constant 0 : i32
    return %c0_i32, %arg0 : i32, i32
  }
  func.func @transform_1(%arg0: i32) -> (i32, i32) {
    %c0_i32 = arith.constant 0 : i32
    %c0_i32_0 = arith.constant 0 : i32
    %c0_i32_1 = arith.constant 0 : i32
    return %c0_i32, %c0_i32_0 : i32, i32
  }
  func.func @transform_2(%arg0: i32) -> (i32, i32) {
    %c0_i32 = arith.constant 0 : i32
    %c0_i32_0 = arith.constant 0 : i32
    %c0_i32_1 = arith.constant 0 : i32
    return %c0_i32, %c0_i32_0 : i32, i32
  }
  func.func @transform_3(%arg0: i32) -> (i32, i32) {
    %c0_i32 = arith.constant 0 : i32
    %c0_i32_0 = arith.constant 0 : i32
    return %c0_i32, %arg0 : i32, i32
  }
  func.func @transform_4(%arg0: i32) -> (i32, i32) {
    %c0_i32 = arith.constant 0 : i32
    %c0_i32_0 = arith.constant 0 : i32
    return %c0_i32, %arg0 : i32, i32
  }
}

module attributes {stable_mosaic.version = 11 : i64} {
  func.func @_conv_mm_kernel(%arg0: i32, %arg1: memref<56x128xbf16, #tpu.memory_space<vmem>>, %arg2: memref<8x56xbf16, #tpu.memory_space<vmem>>, %arg3: memref<8x1xf32, #tpu.memory_space<vmem>>, %arg4: memref<8x128xf32, #tpu.memory_space<vmem>>) attributes {dimension_semantics = [#tpu.dimension_semantics<parallel>], iteration_bounds = array<i64: 1>, scalar_prefetch = 0 : i64, scratch_operands = 0 : i64, tpu.core_type = #tpu.core_type<tc>, window_params = [{transform_indices = @transform_0, window_bounds = array<i64: 56, 128>}, {pipeline_mode = #tpu.pipeline_mode<synchronous>, transform_indices = @transform_1, window_bounds = array<i64: 8, 56>}, {pipeline_mode = #tpu.pipeline_mode<synchronous>, transform_indices = @transform_2, window_bounds = array<i64: 8, 1>}, {transform_indices = @transform_3, window_bounds = array<i64: 8, 128>}]} {
    %c0 = arith.constant 0 : index
    %c0_0 = arith.constant 0 : index
    %0 = vector.load %arg1[%c0, %c0_0] : memref<56x128xbf16, #tpu.memory_space<vmem>>, vector<56x128xbf16>
    %1 = arith.extf %0 : vector<56x128xbf16> to vector<56x128xf32>
    %cst = arith.constant 0.000000e+00 : f32
    %2 = vector.broadcast %cst : f32 to vector<56x128xf32>
    %3 = arith.cmpf ogt, %1, %2 : vector<56x128xf32>
    %cst_1 = arith.constant 0.000000e+00 : f32
    %4 = vector.broadcast %cst_1 : f32 to vector<56x128xf32>
    %5 = arith.minimumf %1, %4 : vector<56x128xf32>
    %6 = math.exp %5 : vector<56x128xf32>
    %cst_2 = arith.constant 1.000000e+00 : f32
    %7 = vector.broadcast %cst_2 : f32 to vector<56x128xf32>
    %8 = arith.subf %6, %7 : vector<56x128xf32>
    %9 = arith.select %3, %1, %8 : vector<56x128xi1>, vector<56x128xf32>
    %10 = arith.truncf %9 : vector<56x128xf32> to vector<56x128xbf16>
    %c0_3 = arith.constant 0 : index
    %c0_4 = arith.constant 0 : index
    %11 = vector.load %arg2[%c0_3, %c0_4] : memref<8x56xbf16, #tpu.memory_space<vmem>>, vector<8x56xbf16>
    %cst_5 = arith.constant dense<0.000000e+00> : vector<8x128xf32>
    %12 = tpu.matmul %11, %10, %cst_5 {dimension_numbers = #tpu.dot_dimension_numbers<[1], [0], [0], [1], [0, 0, 1, 1], [], []>} : vector<8x56xbf16>, vector<56x128xbf16>, vector<8x128xf32> -> vector<8x128xf32>
    %c0_6 = arith.constant 0 : index
    %c0_7 = arith.constant 0 : index
    %13 = vector.load %arg3[%c0_6, %c0_7] : memref<8x1xf32, #tpu.memory_space<vmem>>, vector<8x1xf32>
    %14 = vector.broadcast %13 : vector<8x1xf32> to vector<8x128xf32>
    %15 = arith.addf %12, %14 : vector<8x128xf32>
    %c0_8 = arith.constant 0 : index
    %c0_9 = arith.constant 0 : index
    %16 = vector.load %arg4[%c0_8, %c0_9] : memref<8x128xf32, #tpu.memory_space<vmem>>, vector<8x128xf32>
    tpu.vector_store %arg4[%c0_8, %c0_9], %15 {strides = array<i32>} : memref<8x128xf32, #tpu.memory_space<vmem>>, vector<8x128xf32>,
    return
  }
  func.func @transform_0(%arg0: i32) -> (i32, i32) {
    %c0_i32 = arith.constant 0 : i32
    %c0_i32_0 = arith.constant 0 : i32
    return %c0_i32, %arg0 : i32, i32
  }
  func.func @transform_1(%arg0: i32) -> (i32, i32) {
    %c0_i32 = arith.constant 0 : i32
    %c0_i32_0 = arith.constant 0 : i32
    %c0_i32_1 = arith.constant 0 : i32
    return %c0_i32, %c0_i32_0 : i32, i32
  }
  func.func @transform_2(%arg0: i32) -> (i32, i32) {
    %c0_i32 = arith.constant 0 : i32
    %c0_i32_0 = arith.constant 0 : i32
    %c0_i32_1 = arith.constant 0 : i32
    return %c0_i32, %c0_i32_0 : i32, i32
  }
  func.func @transform_3(%arg0: i32) -> (i32, i32) {
    %c0_i32 = arith.constant 0 : i32
    %c0_i32_0 = arith.constant 0 : i32
    return %c0_i32, %arg0 : i32, i32
  }
}

</mosaic_0001>

<llo_original>
// kernel: encodec_decoder.15
$region0: #{encodec_decoder.15}
  #allocation0 [shape = 'u32[]', space=smem, size = 0x4, offset = 0x4, fixed_abs, tag = 'smem constant byte address 0x4 - core index']
  #allocation1 [shape = 'u32[144,128]{1,0:T(1,128)}', space=vmem, size = 0x12000, scoped, tag = 'internal scratch']
  %s0 = inlined_call_operand.vmem [shape: bf16[32,128], index: 0, kind: input, shape index: {}]
  %s1 = inlined_call_operand.vmem [shape: bf16[128,32], index: 1, kind: input, shape index: {}]
  %s2 = inlined_call_operand.vmem [shape: f32[128,1], index: 2, kind: input, shape index: {}]
  %s3 = inlined_call_operand.vmem [shape: f32[128,128], index: 3, kind: output, shape index: {}]
  %s4 = sld [smem:[#allocation0]]
  $region22: #{encodec_decoder.15} parent=0
    _
  %s6 = ssub.s32 1, %s4
  %s7 = scalar_select 0, %s6, %s4
  // Predicated region
  $region2: #{encodec_decoder.15} parent=0 // pred_check
    _
  $region3: #{encodec_decoder.15} parent=0 // pred_check_branch
    %9 = sbr.rel (0) target = $region5
  $region4: #{encodec_decoder.15} parent=0 // pred_region
    _
  $region5: #{encodec_decoder.15} parent=0 // pred_fallthru
    _
  // Predicated region
  $region6: #{encodec_decoder.15} parent=0 // pred_check
    _
  $region7: #{encodec_decoder.15} parent=0 // pred_check_branch
    %11 = sbr.rel (0) target = $region9
  $region8: #{encodec_decoder.15} parent=0 // pred_region
    _
  $region9: #{encodec_decoder.15} parent=0 // pred_fallthru
    _
  // Predicated region
  $region10: #{encodec_decoder.15} parent=0 // pred_check
    _
  $region11: #{encodec_decoder.15} parent=0 // pred_check_branch
    %13 = sbr.rel (0) target = $region13
  $region12: #{encodec_decoder.15} parent=0 // pred_region
    _
  $region13: #{encodec_decoder.15} parent=0 // pred_fallthru
    _
  %v15 = vld [vmem:[%s0] sm:$0xf]
  %v16 = vld [vmem:[%s0 + $0x4] sm:$0xf]
  %v17 = vld [vmem:[%s0 + $0x8] sm:$0xf]
  %v18 = vld [vmem:[%s0 + $0xc] sm:$0xf]
  %v19 = vld [vmem:[%s1] sm:$0xf]
  %v20 = vld [vmem:[%s1 + $0x4] sm:$0xf]
  %v21 = vld [vmem:[%s1 + $0x8] sm:$0xf]
  %v22 = vld [vmem:[%s1 + $0xc] sm:$0xf]
  %v23 = vld [vmem:[%s1 + $0x10] sm:$0xf]
  %v24 = vld [vmem:[%s1 + $0x14] sm:$0xf]
  %v25 = vld [vmem:[%s1 + $0x18] sm:$0xf]
  %v26 = vld [vmem:[%s1 + $0x1c] sm:$0xf]
  %v27 = vld [vmem:[%s1 + $0x20] sm:$0xf]
  %v28 = vld [vmem:[%s1 + $0x24] sm:$0xf]
  %v29 = vld [vmem:[%s1 + $0x28] sm:$0xf]
  %v30 = vld [vmem:[%s1 + $0x2c] sm:$0xf]
  %v31 = vld [vmem:[%s1 + $0x30] sm:$0xf]
  %v32 = vld [vmem:[%s1 + $0x34] sm:$0xf]
  %v33 = vld [vmem:[%s1 + $0x38] sm:$0xf]
  %v34 = vld [vmem:[%s1 + $0x3c] sm:$0xf]
  %v35 = vld [vmem:[%s2] sm:$0xff]
  %v36 = vld [vmem:[%s2 + $0x8] sm:$0xff]
  %v37 = vld [vmem:[%s2 + $0x10] sm:$0xff]
  %v38 = vld [vmem:[%s2 + $0x18] sm:$0xff]
  %v39 = vld [vmem:[%s2 + $0x20] sm:$0xff]
  %v40 = vld [vmem:[%s2 + $0x28] sm:$0xff]
  %v41 = vld [vmem:[%s2 + $0x30] sm:$0xff]
  %v42 = vld [vmem:[%s2 + $0x38] sm:$0xff]
  %v43 = vld [vmem:[%s2 + $0x40] sm:$0xff]
  %v44 = vld [vmem:[%s2 + $0x48] sm:$0xff]
  %v45 = vld [vmem:[%s2 + $0x50] sm:$0xff]
  %v46 = vld [vmem:[%s2 + $0x58] sm:$0xff]
  %v47 = vld [vmem:[%s2 + $0x60] sm:$0xff]
  %v48 = vld [vmem:[%s2 + $0x68] sm:$0xff]
  %v49 = vld [vmem:[%s2 + $0x70] sm:$0xff]
  %v50 = vld [vmem:[%s2 + $0x78] sm:$0xff]
  %52 = vset.pattern.permute.xlu0 0
  %53 = vperm.xlu0 %52, %v35
  %v54 = vpop.permute.xlu0 %53
  %57 = vset.pattern.permute.xlu0 0
  %58 = vperm.xlu0 %57, %v36
  %v59 = vpop.permute.xlu0 %58
  %62 = vset.pattern.permute.xlu0 0
  %63 = vperm.xlu0 %62, %v37
  %v64 = vpop.permute.xlu0 %63
  %67 = vset.pattern.permute.xlu0 0
  %68 = vperm.xlu0 %67, %v38
  %v69 = vpop.permute.xlu0 %68
  %72 = vset.pattern.permute.xlu0 0
  %73 = vperm.xlu0 %72, %v39
  %v74 = vpop.permute.xlu0 %73
  %77 = vset.pattern.permute.xlu0 0
  %78 = vperm.xlu0 %77, %v40
  %v79 = vpop.permute.xlu0 %78
  %82 = vset.pattern.permute.xlu0 0
  %83 = vperm.xlu0 %82, %v41
  %v84 = vpop.permute.xlu0 %83
  %87 = vset.pattern.permute.xlu0 0
  %88 = vperm.xlu0 %87, %v42
  %v89 = vpop.permute.xlu0 %88
  %92 = vset.pattern.permute.xlu0 0
  %93 = vperm.xlu0 %92, %v43
  %v94 = vpop.permute.xlu0 %93
  %97 = vset.pattern.permute.xlu0 0
  %98 = vperm.xlu0 %97, %v44
  %v99 = vpop.permute.xlu0 %98
  %102 = vset.pattern.permute.xlu0 0
  %103 = vperm.xlu0 %102, %v45
  %v104 = vpop.permute.xlu0 %103
  %107 = vset.pattern.permute.xlu0 0
  %108 = vperm.xlu0 %107, %v46
  %v109 = vpop.permute.xlu0 %108
  %112 = vset.pattern.permute.xlu0 0
  %113 = vperm.xlu0 %112, %v47
  %v114 = vpop.permute.xlu0 %113
  %117 = vset.pattern.permute.xlu0 0
  %118 = vperm.xlu0 %117, %v48
  %v119 = vpop.permute.xlu0 %118
  %122 = vset.pattern.permute.xlu0 0
  %123 = vperm.xlu0 %122, %v49
  %v124 = vpop.permute.xlu0 %123
  %127 = vset.pattern.permute.xlu0 0
  %128 = vperm.xlu0 %127, %v50
  %v129 = vpop.permute.xlu0 %128
  %v147 = vunpack.c.l.b16 %v19
  %v148 = vunpack.c.l.b16 %v20
  %v149 = vunpack.c.l.b16 %v21
  %v150 = vunpack.c.l.b16 %v22
  %v151 = vunpack.c.l.b16 %v23
  %v152 = vunpack.c.l.b16 %v24
  %v153 = vunpack.c.l.b16 %v25
  %v154 = vunpack.c.l.b16 %v26
  %v155 = vunpack.c.l.b16 %v27
  %v156 = vunpack.c.l.b16 %v28
  %v157 = vunpack.c.l.b16 %v29
  %v158 = vunpack.c.l.b16 %v30
  %v159 = vunpack.c.l.b16 %v31
  %v160 = vunpack.c.l.b16 %v32
  %v161 = vunpack.c.l.b16 %v33
  %v162 = vunpack.c.l.b16 %v34
  %v163 = vpack.c.b16 %v148, %v147
  %v164 = vpack.c.b16 %v150, %v149
  %v165 = vpack.c.b16 %v152, %v151
  %v166 = vpack.c.b16 %v154, %v153
  %v167 = vpack.c.b16 %v156, %v155
  %v168 = vpack.c.b16 %v158, %v157
  %v169 = vpack.c.b16 %v160, %v159
  %v170 = vpack.c.b16 %v162, %v161
  %v175 = vunpack.c.l.b16 %v15
  %v176 = vunpack.c.l.b16 %v16
  %v177 = vunpack.c.l.b16 %v17
  %v178 = vunpack.c.l.b16 %v18
  %v179 = vpack.c.b16 %v176, %v175
  %v180 = vpack.c.b16 %v178, %v177
  %vm183 = vcmask 261120
  %v185 = vsel %vm183, %v163, 0
  %v188 = vsel %vm183, %v164, 0
  %v191 = vsel %vm183, %v165, 0
  %v194 = vsel %vm183, %v166, 0
  %v197 = vsel %vm183, %v167, 0
  %v200 = vsel %vm183, %v168, 0
  %v203 = vsel %vm183, %v169, 0
  %v206 = vsel %vm183, %v170, 0
  %208 = vmatprep.subr.bf16.mxu0 0
  %209 = vmatpush1.bf16.msra.mxu0 %v179
  %210 = vmatprep.subr.bf16.mxu0 0
  %211 = vmatpush1.bf16.msra.mxu0 %v180
  %212 = vmatprep.subr.bf16.mxu0 0
  %213 = vmatpush1.bf16.msra.mxu0 0
  %214 = vmatprep.subr.bf16.mxu0 0
  %215 = vmatpush1.bf16.msra.mxu0 0
  %216 = vmatprep.subr.bf16.mxu0 0
  %217 = vmatpush1.bf16.msra.mxu0 0
  %218 = vmatprep.subr.bf16.mxu0 0
  %219 = vmatpush1.bf16.msra.mxu0 0
  %220 = vmatprep.subr.bf16.mxu0 0
  %221 = vmatpush1.bf16.msra.mxu0 0
  %222 = vmatprep.subr.bf16.mxu0 0
  %223 = vmatpush1.bf16.msra.mxu0 0
  %224 = vmatprep.subr.bf16.mxu0 0
  %225 = vmatpush1.bf16.msra.mxu0 0
  %226 = vmatprep.subr.bf16.mxu0 0
  %227 = vmatpush1.bf16.msra.mxu0 0
  %228 = vmatprep.subr.bf16.mxu0 0
  %229 = vmatpush1.bf16.msra.mxu0 0
  %230 = vmatprep.subr.bf16.mxu0 0
  %231 = vmatpush1.bf16.msra.mxu0 0
  %232 = vmatprep.subr.bf16.mxu0 0
  %233 = vmatpush1.bf16.msra.mxu0 0
  %234 = vmatprep.subr.bf16.mxu0 0
  %235 = vmatpush1.bf16.msra.mxu0 0
  %236 = vmatprep.subr.bf16.mxu0 0
  %237 = vmatpush1.bf16.msra.mxu0 0
  %238 = vmatprep.subr.bf16.mxu0 0
  %239 = vmatpush1.bf16.msra.mxu0 0
  %240 = vmatprep.mubr.bf16.mxu0 0
  %241 = vmatmul.mubr.bf16.gmra.mrb[0].mxu0 %v185
  %v242 = vpop.f32.mrb[0].mxu0
  %v243 = vadd.f32 %v54, %v242
  %v244 = vpop.f32.mrb[0].mxu0
  %v245 = vpop.f32.mrb[0].mxu0
  %v246 = vadd.f32 %v59, %v245
  %v247 = vpop.f32.mrb[0].mxu0
  %248 = vmatprep.mubr.bf16.mxu0 0
  %249 = vmatmul.mubr.bf16.gmra.mrb[0].mxu0 %v188
  %v250 = vpop.f32.mrb[0].mxu0
  %v251 = vadd.f32 %v64, %v250
  %v252 = vpop.f32.mrb[0].mxu0
  %v253 = vpop.f32.mrb[0].mxu0
  %v254 = vadd.f32 %v69, %v253
  %v255 = vpop.f32.mrb[0].mxu0
  %256 = vmatprep.mubr.bf16.mxu0 0
  %257 = vmatmul.mubr.bf16.gmra.mrb[0].mxu0 %v191
  %v258 = vpop.f32.mrb[0].mxu0
  %v259 = vadd.f32 %v74, %v258
  %v260 = vpop.f32.mrb[0].mxu0
  %v261 = vpop.f32.mrb[0].mxu0
  %v262 = vadd.f32 %v79, %v261
  %v263 = vpop.f32.mrb[0].mxu0
  %264 = vmatprep.mubr.bf16.mxu0 0
  %265 = vmatmul.mubr.bf16.gmra.mrb[0].mxu0 %v194
  %v266 = vpop.f32.mrb[0].mxu0
  %v267 = vadd.f32 %v84, %v266
  %v268 = vpop.f32.mrb[0].mxu0
  %v269 = vpop.f32.mrb[0].mxu0
  %v270 = vadd.f32 %v89, %v269
  %v271 = vpop.f32.mrb[0].mxu0
  %272 = vmatprep.mubr.bf16.mxu0 0
  %273 = vmatmul.mubr.bf16.gmra.mrb[0].mxu0 %v197
  %v274 = vpop.f32.mrb[0].mxu0
  %v275 = vadd.f32 %v94, %v274
  %v276 = vpop.f32.mrb[0].mxu0
  %v277 = vpop.f32.mrb[0].mxu0
  %v278 = vadd.f32 %v99, %v277
  %v279 = vpop.f32.mrb[0].mxu0
  %280 = vmatprep.mubr.bf16.mxu0 0
  %281 = vmatmul.mubr.bf16.gmra.mrb[0].mxu0 %v200
  %v282 = vpop.f32.mrb[0].mxu0
  %v283 = vadd.f32 %v104, %v282
  %v284 = vpop.f32.mrb[0].mxu0
  %v285 = vpop.f32.mrb[0].mxu0
  %v286 = vadd.f32 %v109, %v285
  %v287 = vpop.f32.mrb[0].mxu0
  %288 = vmatprep.mubr.bf16.mxu0 0
  %289 = vmatmul.mubr.bf16.gmra.mrb[0].mxu0 %v203
  %v290 = vpop.f32.mrb[0].mxu0
  %v291 = vadd.f32 %v114, %v290
  %v292 = vpop.f32.mrb[0].mxu0
  %v293 = vpop.f32.mrb[0].mxu0
  %v294 = vadd.f32 %v119, %v293
  %v295 = vpop.f32.mrb[0].mxu0
  %296 = vmatprep.mubr.bf16.mxu0 0
  %297 = vmatmul.mubr.bf16.gmra.mrb[0].mxu0 %v206
  %v298 = vpop.f32.mrb[0].mxu0
  %v299 = vadd.f32 %v124, %v298
  %v300 = vpop.f32.mrb[0].mxu0
  %v301 = vpop.f32.mrb[0].mxu0
  %v302 = vadd.f32 %v129, %v301
  %v303 = vpop.f32.mrb[0].mxu0
  %304 = vdwg.mxu0
  %305 = vst [vmem:[%s3] sm:$0xff] %v243
  %306 = vst [vmem:[%s3 + $0x8] sm:$0xff] %v246
  %307 = vst [vmem:[%s3 + $0x10] sm:$0xff] %v251
  %308 = vst [vmem:[%s3 + $0x18] sm:$0xff] %v254
  %309 = vst [vmem:[%s3 + $0x20] sm:$0xff] %v259
  %310 = vst [vmem:[%s3 + $0x28] sm:$0xff] %v262
  %311 = vst [vmem:[%s3 + $0x30] sm:$0xff] %v267
  %312 = vst [vmem:[%s3 + $0x38] sm:$0xff] %v270
  %313 = vst [vmem:[%s3 + $0x40] sm:$0xff] %v275
  %314 = vst [vmem:[%s3 + $0x48] sm:$0xff] %v278
  %315 = vst [vmem:[%s3 + $0x50] sm:$0xff] %v283
  %316 = vst [vmem:[%s3 + $0x58] sm:$0xff] %v286
  %317 = vst [vmem:[%s3 + $0x60] sm:$0xff] %v291
  %318 = vst [vmem:[%s3 + $0x68] sm:$0xff] %v294
  %319 = vst [vmem:[%s3 + $0x70] sm:$0xff] %v299
  %320 = vst [vmem:[%s3 + $0x78] sm:$0xff] %v302
  // Predicated region
  $region14: #{encodec_decoder.15} parent=0 // pred_check
    _
  $region15: #{encodec_decoder.15} parent=0 // pred_check_branch
    %322 = sbr.rel (0) target = $region17
  $region16: #{encodec_decoder.15} parent=0 // pred_region
    _
  $region17: #{encodec_decoder.15} parent=0 // pred_fallthru
    _
  // Predicated region
  $region18: #{encodec_decoder.15} parent=0 // pred_check
    _
  $region19: #{encodec_decoder.15} parent=0 // pred_check_branch
    %324 = sbr.rel (0) target = $region21
  $region20: #{encodec_decoder.15} parent=0 // pred_region
    _
  $region21: #{encodec_decoder.15} parent=0 // pred_fallthru
    _

// kernel: encodec_decoder.14
$region0: #{encodec_decoder.14}
  #allocation0 [shape = 'u32[]', space=smem, size = 0x4, offset = 0x4, fixed_abs, tag = 'smem constant byte address 0x4 - core index']
  #allocation1 [shape = 'u32[144,128]{1,0:T(1,128)}', space=vmem, size = 0x12000, scoped, tag = 'internal scratch']
  %s0 = inlined_call_operand.vmem [shape: bf16[224,128], index: 0, kind: input, shape index: {}]
  %s1 = inlined_call_operand.vmem [shape: bf16[32,224], index: 1, kind: input, shape index: {}]
  %s2 = inlined_call_operand.vmem [shape: f32[32,1], index: 2, kind: input, shape index: {}]
  %s3 = inlined_call_operand.vmem [shape: f32[32,128], index: 3, kind: output, shape index: {}]
  %s4 = sld [smem:[#allocation0]]
  $region22: #{encodec_decoder.14} parent=0
    _
  %s6 = ssub.s32 1, %s4
  %s7 = scalar_select 0, %s6, %s4
  // Predicated region
  $region2: #{encodec_decoder.14} parent=0 // pred_check
    _
  $region3: #{encodec_decoder.14} parent=0 // pred_check_branch
    %9 = sbr.rel (0) target = $region5
  $region4: #{encodec_decoder.14} parent=0 // pred_region
    _
  $region5: #{encodec_decoder.14} parent=0 // pred_fallthru
    _
  // Predicated region
  $region6: #{encodec_decoder.14} parent=0 // pred_check
    _
  $region7: #{encodec_decoder.14} parent=0 // pred_check_branch
    %11 = sbr.rel (0) target = $region9
  $region8: #{encodec_decoder.14} parent=0 // pred_region
    _
  $region9: #{encodec_decoder.14} parent=0 // pred_fallthru
    _
  // Predicated region
  $region10: #{encodec_decoder.14} parent=0 // pred_check
    _
  $region11: #{encodec_decoder.14} parent=0 // pred_check_branch
    %13 = sbr.rel (0) target = $region13
  $region12: #{encodec_decoder.14} parent=0 // pred_region
    _
  $region13: #{encodec_decoder.14} parent=0 // pred_fallthru
    _
  %v15 = vld [vmem:[%s0] sm:$0xf]
  %v16 = vld [vmem:[%s0 + $0x4] sm:$0xf]
  %v17 = vld [vmem:[%s0 + $0x8] sm:$0xf]
  %v18 = vld [vmem:[%s0 + $0xc] sm:$0xf]
  %v19 = vld [vmem:[%s0 + $0x10] sm:$0xf]
  %v20 = vld [vmem:[%s0 + $0x14] sm:$0xf]
  %v21 = vld [vmem:[%s0 + $0x18] sm:$0xf]
  %v22 = vld [vmem:[%s0 + $0x1c] sm:$0xf]
  %v23 = vld [vmem:[%s0 + $0x20] sm:$0xf]
  %v24 = vld [vmem:[%s0 + $0x24] sm:$0xf]
  %v25 = vld [vmem:[%s0 + $0x28] sm:$0xf]
  %v26 = vld [vmem:[%s0 + $0x2c] sm:$0xf]
  %v27 = vld [vmem:[%s0 + $0x30] sm:$0xf]
  %v28 = vld [vmem:[%s0 + $0x34] sm:$0xf]
  %v29 = vld [vmem:[%s0 + $0x38] sm:$0xf]
  %v30 = vld [vmem:[%s0 + $0x3c] sm:$0xf]
  %v31 = vld [vmem:[%s0 + $0x40] sm:$0xf]
  %v32 = vld [vmem:[%s0 + $0x44] sm:$0xf]
  %v33 = vld [vmem:[%s0 + $0x48] sm:$0xf]
  %v34 = vld [vmem:[%s0 + $0x4c] sm:$0xf]
  %v35 = vld [vmem:[%s0 + $0x50] sm:$0xf]
  %v36 = vld [vmem:[%s0 + $0x54] sm:$0xf]
  %v37 = vld [vmem:[%s0 + $0x58] sm:$0xf]
  %v38 = vld [vmem:[%s0 + $0x5c] sm:$0xf]
  %v39 = vld [vmem:[%s0 + $0x60] sm:$0xf]
  %v40 = vld [vmem:[%s0 + $0x64] sm:$0xf]
  %v41 = vld [vmem:[%s0 + $0x68] sm:$0xf]
  %v42 = vld [vmem:[%s0 + $0x6c] sm:$0xf]
  %v43 = vld [vmem:[%s1] sm:$0xff]
  %v44 = vld [vmem:[%s1 + $0x8] sm:$0xff]
  %v45 = vld [vmem:[%s1 + $0x10] sm:$0xff]
  %v46 = vld [vmem:[%s1 + $0x18] sm:$0xff]
  %v47 = vld [vmem:[%s2] sm:$0xff]
  %v48 = vld [vmem:[%s2 + $0x8] sm:$0xff]
  %v49 = vld [vmem:[%s2 + $0x10] sm:$0xff]
  %v50 = vld [vmem:[%s2 + $0x18] sm:$0xff]
  %52 = vset.pattern.permute.xlu0 0
  %53 = vperm.xlu0 %52, %v47
  %v54 = vpop.permute.xlu0 %53
  %57 = vset.pattern.permute.xlu0 0
  %58 = vperm.xlu0 %57, %v48
  %v59 = vpop.permute.xlu0 %58
  %62 = vset.pattern.permute.xlu0 0
  %63 = vperm.xlu0 %62, %v49
  %v64 = vpop.permute.xlu0 %63
  %67 = vset.pattern.permute.xlu0 0
  %68 = vperm.xlu0 %67, %v50
  %v69 = vpop.permute.xlu0 %68
  %v75 = vunpack.c.l.b16 %v43
  %v76 = vunpack.c.h.b16 %v43
  %v77 = vunpack.c.l.b16 %v44
  %v78 = vunpack.c.h.b16 %v44
  %v79 = vunpack.c.l.b16 %v45
  %v80 = vunpack.c.h.b16 %v45
  %v81 = vunpack.c.l.b16 %v46
  %v82 = vunpack.c.h.b16 %v46
  %v83 = vpack.c.b16 %v77, %v75
  %v84 = vpack.c.b16 %v78, %v76
  %v85 = vpack.c.b16 %v81, %v79
  %v86 = vpack.c.b16 %v82, %v80
  %v117 = vunpack.c.l.b16 %v15
  %v118 = vunpack.c.l.b16 %v16
  %v119 = vunpack.c.l.b16 %v17
  %v120 = vunpack.c.l.b16 %v18
  %v121 = vunpack.c.l.b16 %v19
  %v122 = vunpack.c.l.b16 %v20
  %v123 = vunpack.c.l.b16 %v21
  %v124 = vunpack.c.l.b16 %v22
  %v125 = vunpack.c.l.b16 %v23
  %v126 = vunpack.c.l.b16 %v24
  %v127 = vunpack.c.l.b16 %v25
  %v128 = vunpack.c.l.b16 %v26
  %v129 = vunpack.c.l.b16 %v27
  %v130 = vunpack.c.l.b16 %v28
  %v131 = vunpack.c.l.b16 %v29
  %v132 = vunpack.c.l.b16 %v30
  %v133 = vunpack.c.l.b16 %v31
  %v134 = vunpack.c.l.b16 %v32
  %v135 = vunpack.c.l.b16 %v33
  %v136 = vunpack.c.l.b16 %v34
  %v137 = vunpack.c.l.b16 %v35
  %v138 = vunpack.c.l.b16 %v36
  %v139 = vunpack.c.l.b16 %v37
  %v140 = vunpack.c.l.b16 %v38
  %v141 = vunpack.c.l.b16 %v39
  %v142 = vunpack.c.l.b16 %v40
  %v143 = vunpack.c.l.b16 %v41
  %v144 = vunpack.c.l.b16 %v42
  %v145 = vpack.c.b16 %v118, %v117
  %v146 = vpack.c.b16 %v120, %v119
  %v147 = vpack.c.b16 %v122, %v121
  %v148 = vpack.c.b16 %v124, %v123
  %v149 = vpack.c.b16 %v126, %v125
  %v150 = vpack.c.b16 %v128, %v127
  %v151 = vpack.c.b16 %v130, %v129
  %v152 = vpack.c.b16 %v132, %v131
  %v153 = vpack.c.b16 %v134, %v133
  %v154 = vpack.c.b16 %v136, %v135
  %v155 = vpack.c.b16 %v138, %v137
  %v156 = vpack.c.b16 %v140, %v139
  %v157 = vpack.c.b16 %v142, %v141
  %v158 = vpack.c.b16 %v144, %v143
  %vm173 = vcmask 785408
  %v175 = vsel %vm173, %v84, 0
  %v178 = vsel %vm173, %v86, 0
  %180 = vmatprep.subr.bf16.mxu0 0
  %181 = vmatpush1.bf16.msra.mxu0 %v145
  %182 = vmatprep.subr.bf16.mxu0 0
  %183 = vmatpush1.bf16.msra.mxu0 %v146
  %184 = vmatprep.subr.bf16.mxu0 0
  %185 = vmatpush1.bf16.msra.mxu0 %v147
  %186 = vmatprep.subr.bf16.mxu0 0
  %187 = vmatpush1.bf16.msra.mxu0 %v148
  %188 = vmatprep.subr.bf16.mxu0 0
  %189 = vmatpush1.bf16.msra.mxu0 %v149
  %190 = vmatprep.subr.bf16.mxu0 0
  %191 = vmatpush1.bf16.msra.mxu0 %v150
  %192 = vmatprep.subr.bf16.mxu0 0
  %193 = vmatpush1.bf16.msra.mxu0 %v151
  %194 = vmatprep.subr.bf16.mxu0 0
  %195 = vmatpush1.bf16.msra.mxu0 %v152
  %196 = vmatprep.subr.bf16.mxu0 0
  %197 = vmatpush1.bf16.msra.mxu0 %v153
  %198 = vmatprep.subr.bf16.mxu0 0
  %199 = vmatpush1.bf16.msra.mxu0 %v154
  %200 = vmatprep.subr.bf16.mxu0 0
  %201 = vmatpush1.bf16.msra.mxu0 %v155
  %202 = vmatprep.subr.bf16.mxu0 0
  %203 = vmatpush1.bf16.msra.mxu0 %v156
  %204 = vmatprep.subr.bf16.mxu0 0
  %205 = vmatpush1.bf16.msra.mxu0 %v157
  %206 = vmatprep.subr.bf16.mxu0 0
  %207 = vmatpush1.bf16.msra.mxu0 %v158
  %208 = vmatprep.subr.bf16.mxu0 0
  %209 = vmatpush1.bf16.msra.mxu0 0
  %210 = vmatprep.subr.bf16.mxu0 0
  %211 = vmatpush1.bf16.msra.mxu0 0
  %212 = vmatprep.mubr.bf16.mxu0 %v175
  %213 = vmatmul.mubr.bf16.gmra.mrb[0].mxu0 %v83
  %v214 = vpop.f32.mrb[0].mxu0
  %v215 = vadd.f32 %v54, %v214
  %v216 = vpop.f32.mrb[0].mxu0
  %v217 = vpop.f32.mrb[0].mxu0
  %v218 = vadd.f32 %v59, %v217
  %v219 = vpop.f32.mrb[0].mxu0
  %220 = vmatprep.mubr.bf16.mxu0 %v178
  %221 = vmatmul.mubr.bf16.gmra.mrb[0].mxu0 %v85
  %v222 = vpop.f32.mrb[0].mxu0
  %v223 = vadd.f32 %v64, %v222
  %v224 = vpop.f32.mrb[0].mxu0
  %v225 = vpop.f32.mrb[0].mxu0
  %v226 = vadd.f32 %v69, %v225
  %v227 = vpop.f32.mrb[0].mxu0
  %228 = vdwg.mxu0
  %229 = vst [vmem:[%s3] sm:$0xff] %v215
  %230 = vst [vmem:[%s3 + $0x8] sm:$0xff] %v218
  %231 = vst [vmem:[%s3 + $0x10] sm:$0xff] %v223
  %232 = vst [vmem:[%s3 + $0x18] sm:$0xff] %v226
  // Predicated region
  $region14: #{encodec_decoder.14} parent=0 // pred_check
    _
  $region15: #{encodec_decoder.14} parent=0 // pred_check_branch
    %234 = sbr.rel (0) target = $region17
  $region16: #{encodec_decoder.14} parent=0 // pred_region
    _
  $region17: #{encodec_decoder.14} parent=0 // pred_fallthru
    _
  // Predicated region
  $region18: #{encodec_decoder.14} parent=0 // pred_check
    _
  $region19: #{encodec_decoder.14} parent=0 // pred_check_branch
    %236 = sbr.rel (0) target = $region21
  $region20: #{encodec_decoder.14} parent=0 // pred_region
    _
  $region21: #{encodec_decoder.14} parent=0 // pred_fallthru
    _

// kernel: encodec_decoder.16
$region0: #{encodec_decoder.16}
  #allocation0 [shape = 'u32[]', space=smem, size = 0x4, offset = 0x4, fixed_abs, tag = 'smem constant byte address 0x4 - core index']
  #allocation1 [shape = 'u32[144,128]{1,0:T(1,128)}', space=vmem, size = 0x12000, scoped, tag = 'internal scratch']
  %s0 = inlined_call_operand.vmem [shape: f32[8,2,128], index: 0, kind: input, shape index: {}]
  %s1 = inlined_call_operand.vmem [shape: bf16[32,128], index: 1, kind: input, shape index: {}]
  %s2 = inlined_call_operand.vmem [shape: f32[8,2,32], index: 2, kind: output, shape index: {}]
  %s3 = sld [smem:[#allocation0]]
  $region25: #{encodec_decoder.16} parent=0
    _
  %s5 = ssub.s32 1, %s3
  %s6 = scalar_select 0, %s5, %s3
  // Predicated region
  $region2: #{encodec_decoder.16} parent=0 // pred_check
    _
  $region3: #{encodec_decoder.16} parent=0 // pred_check_branch
    %8 = sbr.rel (0) target = $region5
  $region4: #{encodec_decoder.16} parent=0 // pred_region
    _
  $region5: #{encodec_decoder.16} parent=0 // pred_fallthru
    _
  // Predicated region
  $region6: #{encodec_decoder.16} parent=0 // pred_check
    _
  $region7: #{encodec_decoder.16} parent=0 // pred_check_branch
    %10 = sbr.rel (0) target = $region9
  $region8: #{encodec_decoder.16} parent=0 // pred_region
    _
  $region9: #{encodec_decoder.16} parent=0 // pred_fallthru
    _
  %v12 = vld [vmem:[%s1] sm:$0xf]
  %v13 = vld [vmem:[%s1 + $0x4] sm:$0xf]
  %v14 = vld [vmem:[%s1 + $0x8] sm:$0xf]
  %v15 = vld [vmem:[%s1 + $0xc] sm:$0xf]
  loop: start=0, step=1, limit=8
  $region10: #{encodec_decoder.16} parent=0 // loop_pre_header
    _
  $region11: #{encodec_decoder.16} parent=0 // loop_header
    %s17 = sphi 0, %s21
    %p18 = scmp.ge.s32.totalorder %s17, 8
    %v22 = vphi 0.0, %v111
    %v23 = vphi 0.0, %v105
  $region12: #{encodec_decoder.16} parent=0 // loop_header_branch
    %20 = sbr.rel (%p18) target = $region16
  $region13: #{encodec_decoder.16} parent=0 // loop_body
    %s24 = smul.u32 %s17, 2
    %s25 = scalar_lea.vmem %s0, %s24
    %v26 = vld [vmem:[%s25] sm:$0x3]
    %v27 = vpack.c.bf16 %v22, %v22
    %29 = vrot.lane.b32.xlu0 %v27, 32
    %v30 = vpop.permute.xlu0 %29
    %v35 = vunpack.c.l.b16 %v12
    %v36 = vunpack.c.l.b16 %v13
    %v37 = vunpack.c.l.b16 %v14
    %v38 = vunpack.c.l.b16 %v15
    %v39 = vpack.c.b16 %v36, %v35
    %v40 = vpack.c.b16 %v38, %v37
    %vm43 = vcmask 261120
    %v45 = vsel %vm43, %v30, 0
    %47 = vmatprep.subr.bf16.mxu0 0
    %48 = vmatpush1.bf16.msra.mxu0 %v39
    %49 = vmatprep.subr.bf16.mxu0 0
    %50 = vmatpush1.bf16.msra.mxu0 %v40
    %51 = vmatprep.subr.bf16.mxu0 0
    %52 = vmatpush1.bf16.msra.mxu0 0
    %53 = vmatprep.subr.bf16.mxu0 0
    %54 = vmatpush1.bf16.msra.mxu0 0
    %55 = vmatprep.subr.bf16.mxu0 0
    %56 = vmatpush1.bf16.msra.mxu0 0
    %57 = vmatprep.subr.bf16.mxu0 0
    %58 = vmatpush1.bf16.msra.mxu0 0
    %59 = vmatprep.subr.bf16.mxu0 0
    %60 = vmatpush1.bf16.msra.mxu0 0
    %61 = vmatprep.subr.bf16.mxu0 0
    %62 = vmatpush1.bf16.msra.mxu0 0
    %63 = vmatprep.subr.bf16.mxu0 0
    %64 = vmatpush1.bf16.msra.mxu0 0
    %65 = vmatprep.subr.bf16.mxu0 0
    %66 = vmatpush1.bf16.msra.mxu0 0
    %67 = vmatprep.subr.bf16.mxu0 0
    %68 = vmatpush1.bf16.msra.mxu0 0
    %69 = vmatprep.subr.bf16.mxu0 0
    %70 = vmatpush1.bf16.msra.mxu0 0
    %71 = vmatprep.subr.bf16.mxu0 0
    %72 = vmatpush1.bf16.msra.mxu0 0
    %73 = vmatprep.subr.bf16.mxu0 0
    %74 = vmatpush1.bf16.msra.mxu0 0
    %75 = vmatprep.subr.bf16.mxu0 0
    %76 = vmatpush1.bf16.msra.mxu0 0
    %77 = vmatprep.subr.bf16.mxu0 0
    %78 = vmatpush1.bf16.msra.mxu0 0
    %79 = vmatprep.mubr.bf16.mxu0 0
    %80 = vmatmul.mubr.bf16.gmra.mrb[0].mxu0 %v45
    %v81 = vpop.f32.mrb[0].mxu0
    %v82 = vadd.f32 0.0, %v81
    %v83 = vpop.f32.mrb[0].mxu0
    %v84 = vpop.f32.mrb[0].mxu0
    %v85 = vpop.f32.mrb[0].mxu0
    %86 = vdwg.mxu0
    %v87 = vadd.f32 %v26, %v82
    %v88 = vxor.u32 %v87, 2147483648
    %v89 = vmul.f32 %v88, 1.442695
    %v90 = vpow.pop %v89
    %v91 = vadd.f32 %v90, 1.0
    %v92 = vrcp.pop %v91
    %v93 = vmul.f32 1.0, %v92
    %v94 = vtanh.pop %v87
    %v95 = vmul.f32 %v93, %v23
    %97 = vrot.lane.b32.xlu0 %v94, 64
    %v98 = vpop.permute.xlu0 %97
    %v100 = vmul.f32 %v93, %v98
    %102 = vrot.lane.b32.xlu0 %v100, 32
    %v103 = vpop.permute.xlu0 %102
    %v105 = vadd.f32 %v95, %v103
    %v106 = vtanh.pop %v105
    %108 = vrot.lane.b32.xlu0 %v106, 64
    %v109 = vpop.permute.xlu0 %108
    %v111 = vmul.f32 %v93, %v109
    %113 = vrot.lane.b32.xlu0 %v111, 32
    %v114 = vpop.permute.xlu0 %113
    %s116 = scalar_lea.vmem %s2, %s24
    %vm117 = vcmask 254976
    %118 = vst.msk [vmem:[%s116] sm:$0x3] %vm117, %v114
  $region14: #{encodec_decoder.16} parent=0 // loop_footer
    %s21 = sadd.s32 1, %s17
  $region15: #{encodec_decoder.16} parent=0 // loop_footer_branch
    %16 = sbr.rel target = $region11
  $region16: #{encodec_decoder.16} parent=0 // loop_exit
    _
  // Predicated region
  $region17: #{encodec_decoder.16} parent=0 // pred_check
    _
  $region18: #{encodec_decoder.16} parent=0 // pred_check_branch
    %120 = sbr.rel (0) target = $region20
  $region19: #{encodec_decoder.16} parent=0 // pred_region
    _
  $region20: #{encodec_decoder.16} parent=0 // pred_fallthru
    _
  // Predicated region
  $region21: #{encodec_decoder.16} parent=0 // pred_check
    _
  $region22: #{encodec_decoder.16} parent=0 // pred_check_branch
    %122 = sbr.rel (0) target = $region24
  $region23: #{encodec_decoder.16} parent=0 // pred_region
    _
  $region24: #{encodec_decoder.16} parent=0 // pred_fallthru
    _

// kernel: encodec_decoder.18
$region0: #{encodec_decoder.18}
  #allocation0 [shape = 'u32[]', space=smem, size = 0x4, offset = 0x4, fixed_abs, tag = 'smem constant byte address 0x4 - core index']
  #allocation1 [shape = 'u32[144,128]{1,0:T(1,128)}', space=vmem, size = 0x12000, scoped, tag = 'internal scratch']
  %s0 = inlined_call_operand.vmem [shape: f32[8,2,128], index: 0, kind: input, shape index: {}]
  %s1 = inlined_call_operand.vmem [shape: bf16[32,128], index: 1, kind: input, shape index: {}]
  %s2 = inlined_call_operand.vmem [shape: f32[8,2,32], index: 2, kind: input, shape index: {}]
  %s3 = inlined_call_operand.vmem [shape: f32[8,2,32], index: 3, kind: output, shape index: {}]
  %s4 = sld [smem:[#allocation0]]
  $region29: #{encodec_decoder.18} parent=0
    _
  %s6 = ssub.s32 1, %s4
  %s7 = scalar_select 0, %s6, %s4
  // Predicated region
  $region2: #{encodec_decoder.18} parent=0 // pred_check
    _
  $region3: #{encodec_decoder.18} parent=0 // pred_check_branch
    %9 = sbr.rel (0) target = $region5
  $region4: #{encodec_decoder.18} parent=0 // pred_region
    _
  $region5: #{encodec_decoder.18} parent=0 // pred_fallthru
    _
  // Predicated region
  $region6: #{encodec_decoder.18} parent=0 // pred_check
    _
  $region7: #{encodec_decoder.18} parent=0 // pred_check_branch
    %11 = sbr.rel (0) target = $region9
  $region8: #{encodec_decoder.18} parent=0 // pred_region
    _
  $region9: #{encodec_decoder.18} parent=0 // pred_fallthru
    _
  // Predicated region
  $region10: #{encodec_decoder.18} parent=0 // pred_check
    _
  $region11: #{encodec_decoder.18} parent=0 // pred_check_branch
    %13 = sbr.rel (0) target = $region13
  $region12: #{encodec_decoder.18} parent=0 // pred_region
    _
  $region13: #{encodec_decoder.18} parent=0 // pred_fallthru
    _
  %v15 = vld [vmem:[%s1] sm:$0xf]
  %v16 = vld [vmem:[%s1 + $0x4] sm:$0xf]
  %v17 = vld [vmem:[%s1 + $0x8] sm:$0xf]
  %v18 = vld [vmem:[%s1 + $0xc] sm:$0xf]
  loop: start=0, step=1, limit=8
  $region14: #{encodec_decoder.18} parent=0 // loop_pre_header
    _
  $region15: #{encodec_decoder.18} parent=0 // loop_header
    %s20 = sphi 0, %s24
    %p21 = scmp.ge.s32.totalorder %s20, 8
    %v25 = vphi 0.0, %v114
    %v26 = vphi 0.0, %v108
  $region16: #{encodec_decoder.18} parent=0 // loop_header_branch
    %23 = sbr.rel (%p21) target = $region20
  $region17: #{encodec_decoder.18} parent=0 // loop_body
    %s27 = smul.u32 %s20, 2
    %s28 = scalar_lea.vmem %s0, %s27
    %v29 = vld [vmem:[%s28] sm:$0x3]
    %v30 = vpack.c.bf16 %v25, %v25
    %32 = vrot.lane.b32.xlu0 %v30, 32
    %v33 = vpop.permute.xlu0 %32
    %v38 = vunpack.c.l.b16 %v15
    %v39 = vunpack.c.l.b16 %v16
    %v40 = vunpack.c.l.b16 %v17
    %v41 = vunpack.c.l.b16 %v18
    %v42 = vpack.c.b16 %v39, %v38
    %v43 = vpack.c.b16 %v41, %v40
    %vm46 = vcmask 261120
    %v48 = vsel %vm46, %v33, 0
    %50 = vmatprep.subr.bf16.mxu0 0
    %51 = vmatpush1.bf16.msra.mxu0 %v42
    %52 = vmatprep.subr.bf16.mxu0 0
    %53 = vmatpush1.bf16.msra.mxu0 %v43
    %54 = vmatprep.subr.bf16.mxu0 0
    %55 = vmatpush1.bf16.msra.mxu0 0
    %56 = vmatprep.subr.bf16.mxu0 0
    %57 = vmatpush1.bf16.msra.mxu0 0
    %58 = vmatprep.subr.bf16.mxu0 0
    %59 = vmatpush1.bf16.msra.mxu0 0
    %60 = vmatprep.subr.bf16.mxu0 0
    %61 = vmatpush1.bf16.msra.mxu0 0
    %62 = vmatprep.subr.bf16.mxu0 0
    %63 = vmatpush1.bf16.msra.mxu0 0
    %64 = vmatprep.subr.bf16.mxu0 0
    %65 = vmatpush1.bf16.msra.mxu0 0
    %66 = vmatprep.subr.bf16.mxu0 0
    %67 = vmatpush1.bf16.msra.mxu0 0
    %68 = vmatprep.subr.bf16.mxu0 0
    %69 = vmatpush1.bf16.msra.mxu0 0
    %70 = vmatprep.subr.bf16.mxu0 0
    %71 = vmatpush1.bf16.msra.mxu0 0
    %72 = vmatprep.subr.bf16.mxu0 0
    %73 = vmatpush1.bf16.msra.mxu0 0
    %74 = vmatprep.subr.bf16.mxu0 0
    %75 = vmatpush1.bf16.msra.mxu0 0
    %76 = vmatprep.subr.bf16.mxu0 0
    %77 = vmatpush1.bf16.msra.mxu0 0
    %78 = vmatprep.subr.bf16.mxu0 0
    %79 = vmatpush1.bf16.msra.mxu0 0
    %80 = vmatprep.subr.bf16.mxu0 0
    %81 = vmatpush1.bf16.msra.mxu0 0
    %82 = vmatprep.mubr.bf16.mxu0 0
    %83 = vmatmul.mubr.bf16.gmra.mrb[0].mxu0 %v48
    %v84 = vpop.f32.mrb[0].mxu0
    %v85 = vadd.f32 0.0, %v84
    %v86 = vpop.f32.mrb[0].mxu0
    %v87 = vpop.f32.mrb[0].mxu0
    %v88 = vpop.f32.mrb[0].mxu0
    %89 = vdwg.mxu0
    %v90 = vadd.f32 %v29, %v85
    %v91 = vxor.u32 %v90, 2147483648
    %v92 = vmul.f32 %v91, 1.442695
    %v93 = vpow.pop %v92
    %v94 = vadd.f32 %v93, 1.0
    %v95 = vrcp.pop %v94
    %v96 = vmul.f32 1.0, %v95
    %v97 = vtanh.pop %v90
    %v98 = vmul.f32 %v96, %v26
    %100 = vrot.lane.b32.xlu0 %v97, 64
    %v101 = vpop.permute.xlu0 %100
    %v103 = vmul.f32 %v96, %v101
    %105 = vrot.lane.b32.xlu0 %v103, 32
    %v106 = vpop.permute.xlu0 %105
    %v108 = vadd.f32 %v98, %v106
    %v109 = vtanh.pop %v108
    %111 = vrot.lane.b32.xlu0 %v109, 64
    %v112 = vpop.permute.xlu0 %111
    %v114 = vmul.f32 %v96, %v112
    %s115 = scalar_lea.vmem %s2, %s27
    %v116 = vld [vmem:[%s115] sm:$0x3]
    %118 = vrot.lane.b32.xlu0 %v116, 96
    %v119 = vpop.permute.xlu0 %118
    %v121 = vadd.f32 %v114, %v119
    %123 = vrot.lane.b32.xlu0 %v121, 32
    %v124 = vpop.permute.xlu0 %123
    %s126 = scalar_lea.vmem %s3, %s27
    %vm127 = vcmask 254976
    %128 = vst.msk [vmem:[%s126] sm:$0x3] %vm127, %v124
  $region18: #{encodec_decoder.18} parent=0 // loop_footer
    %s24 = sadd.s32 1, %s20
  $region19: #{encodec_decoder.18} parent=0 // loop_footer_branch
    %19 = sbr.rel target = $region15
  $region20: #{encodec_decoder.18} parent=0 // loop_exit
    _
  // Predicated region
  $region21: #{encodec_decoder.18} parent=0 // pred_check
    _
  $region22: #{encodec_decoder.18} parent=0 // pred_check_branch
    %130 = sbr.rel (0) target = $region24
  $region23: #{encodec_decoder.18} parent=0 // pred_region
    _
  $region24: #{encodec_decoder.18} parent=0 // pred_fallthru
    _
  // Predicated region
  $region25: #{encodec_decoder.18} parent=0 // pred_check
    _
  $region26: #{encodec_decoder.18} parent=0 // pred_check_branch
    %132 = sbr.rel (0) target = $region28
  $region27: #{encodec_decoder.18} parent=0 // pred_region
    _
  $region28: #{encodec_decoder.18} parent=0 // pred_fallthru
    _

// kernel: encodec_decoder.19
$region0: #{encodec_decoder.19}
  #allocation0 [shape = 'u32[]', space=smem, size = 0x4, offset = 0x4, fixed_abs, tag = 'smem constant byte address 0x4 - core index']
  #allocation1 [shape = 'u32[144,128]{1,0:T(1,128)}', space=vmem, size = 0x12000, scoped, tag = 'internal scratch']
  %s0 = inlined_call_operand.vmem [shape: bf16[64,128], index: 0, kind: input, shape index: {}]
  %s1 = inlined_call_operand.vmem [shape: bf16[32,64], index: 1, kind: input, shape index: {}]
  %s2 = inlined_call_operand.vmem [shape: f32[32,1], index: 2, kind: input, shape index: {}]
  %s3 = inlined_call_operand.vmem [shape: f32[32,128], index: 3, kind: output, shape index: {}]
  %s4 = sld [smem:[#allocation0]]
  $region22: #{encodec_decoder.19} parent=0
    _
  %s6 = ssub.s32 1, %s4
  %s7 = scalar_select 0, %s6, %s4
  // Predicated region
  $region2: #{encodec_decoder.19} parent=0 // pred_check
    _
  $region3: #{encodec_decoder.19} parent=0 // pred_check_branch
    %9 = sbr.rel (0) target = $region5
  $region4: #{encodec_decoder.19} parent=0 // pred_region
    _
  $region5: #{encodec_decoder.19} parent=0 // pred_fallthru
    _
  // Predicated region
  $region6: #{encodec_decoder.19} parent=0 // pred_check
    _
  $region7: #{encodec_decoder.19} parent=0 // pred_check_branch
    %11 = sbr.rel (0) target = $region9
  $region8: #{encodec_decoder.19} parent=0 // pred_region
    _
  $region9: #{encodec_decoder.19} parent=0 // pred_fallthru
    _
  // Predicated region
  $region10: #{encodec_decoder.19} parent=0 // pred_check
    _
  $region11: #{encodec_decoder.19} parent=0 // pred_check_branch
    %13 = sbr.rel (0) target = $region13
  $region12: #{encodec_decoder.19} parent=0 // pred_region
    _
  $region13: #{encodec_decoder.19} parent=0 // pred_fallthru
    _
  %v15 = vld [vmem:[%s0] sm:$0xf]
  %v16 = vld [vmem:[%s0 + $0x4] sm:$0xf]
  %v17 = vld [vmem:[%s0 + $0x8] sm:$0xf]
  %v18 = vld [vmem:[%s0 + $0xc] sm:$0xf]
  %v19 = vld [vmem:[%s0 + $0x10] sm:$0xf]
  %v20 = vld [vmem:[%s0 + $0x14] sm:$0xf]
  %v21 = vld [vmem:[%s0 + $0x18] sm:$0xf]
  %v22 = vld [vmem:[%s0 + $0x1c] sm:$0xf]
  %v23 = vunpack.c.l.bf16 %v15
  %v24 = vunpack.c.l.bf16 %v16
  %v25 = vunpack.c.l.bf16 %v17
  %v26 = vunpack.c.l.bf16 %v18
  %v27 = vunpack.c.l.bf16 %v19
  %v28 = vunpack.c.l.bf16 %v20
  %v29 = vunpack.c.l.bf16 %v21
  %v30 = vunpack.c.l.bf16 %v22
  %vm31 = vcmp.gt.f32.partialorder %v23, 0.0
  %vm32 = vcmp.gt.f32.partialorder %v24, 0.0
  %vm33 = vcmp.gt.f32.partialorder %v25, 0.0
  %vm34 = vcmp.gt.f32.partialorder %v26, 0.0
  %vm35 = vcmp.gt.f32.partialorder %v27, 0.0
  %vm36 = vcmp.gt.f32.partialorder %v28, 0.0
  %vm37 = vcmp.gt.f32.partialorder %v29, 0.0
  %vm38 = vcmp.gt.f32.partialorder %v30, 0.0
  %v39 = vmin.f32 %v23, 0.0
  %v40 = vmin.f32 %v24, 0.0
  %v41 = vmin.f32 %v25, 0.0
  %v42 = vmin.f32 %v26, 0.0
  %v43 = vmin.f32 %v27, 0.0
  %v44 = vmin.f32 %v28, 0.0
  %v45 = vmin.f32 %v29, 0.0
  %v46 = vmin.f32 %v30, 0.0
  %v47 = vmul.f32 %v39, 1.442695
  %v48 = vpow.pop %v47
  %v49 = vmul.f32 %v40, 1.442695
  %v50 = vpow.pop %v49
  %v51 = vmul.f32 %v41, 1.442695
  %v52 = vpow.pop %v51
  %v53 = vmul.f32 %v42, 1.442695
  %v54 = vpow.pop %v53
  %v55 = vmul.f32 %v43, 1.442695
  %v56 = vpow.pop %v55
  %v57 = vmul.f32 %v44, 1.442695
  %v58 = vpow.pop %v57
  %v59 = vmul.f32 %v45, 1.442695
  %v60 = vpow.pop %v59
  %v61 = vmul.f32 %v46, 1.442695
  %v62 = vpow.pop %v61
  %v63 = vsub.f32 %v48, 1.0
  %v64 = vsub.f32 %v50, 1.0
  %v65 = vsub.f32 %v52, 1.0
  %v66 = vsub.f32 %v54, 1.0
  %v67 = vsub.f32 %v56, 1.0
  %v68 = vsub.f32 %v58, 1.0
  %v69 = vsub.f32 %v60, 1.0
  %v70 = vsub.f32 %v62, 1.0
  %v71 = vsel %vm31, %v23, %v63
  %v72 = vsel %vm32, %v24, %v64
  %v73 = vsel %vm33, %v25, %v65
  %v74 = vsel %vm34, %v26, %v66
  %v75 = vsel %vm35, %v27, %v67
  %v76 = vsel %vm36, %v28, %v68
  %v77 = vsel %vm37, %v29, %v69
  %v78 = vsel %vm38, %v30, %v70
  %v79 = vpack.c.bf16 %v72, %v71
  %v80 = vpack.c.bf16 %v74, %v73
  %v81 = vpack.c.bf16 %v76, %v75
  %v82 = vpack.c.bf16 %v78, %v77
  %v83 = vld [vmem:[%s1] sm:$0xf]
  %v84 = vld [vmem:[%s1 + $0x4] sm:$0xf]
  %v85 = vld [vmem:[%s1 + $0x8] sm:$0xf]
  %v86 = vld [vmem:[%s1 + $0xc] sm:$0xf]
  %v87 = vld [vmem:[%s2] sm:$0xff]
  %v88 = vld [vmem:[%s2 + $0x8] sm:$0xff]
  %v89 = vld [vmem:[%s2 + $0x10] sm:$0xff]
  %v90 = vld [vmem:[%s2 + $0x18] sm:$0xff]
  %92 = vset.pattern.permute.xlu0 0
  %93 = vperm.xlu0 %92, %v87
  %v94 = vpop.permute.xlu0 %93
  %97 = vset.pattern.permute.xlu0 0
  %98 = vperm.xlu0 %97, %v88
  %v99 = vpop.permute.xlu0 %98
  %102 = vset.pattern.permute.xlu0 0
  %103 = vperm.xlu0 %102, %v89
  %v104 = vpop.permute.xlu0 %103
  %107 = vset.pattern.permute.xlu0 0
  %108 = vperm.xlu0 %107, %v90
  %v109 = vpop.permute.xlu0 %108
  %v115 = vunpack.c.l.b16 %v83
  %v116 = vunpack.c.l.b16 %v84
  %v117 = vunpack.c.l.b16 %v85
  %v118 = vunpack.c.l.b16 %v86
  %v119 = vpack.c.b16 %v116, %v115
  %v120 = vpack.c.b16 %v118, %v117
  %vm121 = vcmask 523264
  %v123 = vsel %vm121, %v119, 0
  %v126 = vsel %vm121, %v120, 0
  %128 = vmatprep.subr.bf16.mxu0 0
  %129 = vmatpush1.bf16.msra.mxu0 %v79
  %130 = vmatprep.subr.bf16.mxu0 0
  %131 = vmatpush1.bf16.msra.mxu0 %v80
  %132 = vmatprep.subr.bf16.mxu0 0
  %133 = vmatpush1.bf16.msra.mxu0 %v81
  %134 = vmatprep.subr.bf16.mxu0 0
  %135 = vmatpush1.bf16.msra.mxu0 %v82
  %136 = vmatprep.subr.bf16.mxu0 0
  %137 = vmatpush1.bf16.msra.mxu0 0
  %138 = vmatprep.subr.bf16.mxu0 0
  %139 = vmatpush1.bf16.msra.mxu0 0
  %140 = vmatprep.subr.bf16.mxu0 0
  %141 = vmatpush1.bf16.msra.mxu0 0
  %142 = vmatprep.subr.bf16.mxu0 0
  %143 = vmatpush1.bf16.msra.mxu0 0
  %144 = vmatprep.subr.bf16.mxu0 0
  %145 = vmatpush1.bf16.msra.mxu0 0
  %146 = vmatprep.subr.bf16.mxu0 0
  %147 = vmatpush1.bf16.msra.mxu0 0
  %148 = vmatprep.subr.bf16.mxu0 0
  %149 = vmatpush1.bf16.msra.mxu0 0
  %150 = vmatprep.subr.bf16.mxu0 0
  %151 = vmatpush1.bf16.msra.mxu0 0
  %152 = vmatprep.subr.bf16.mxu0 0
  %153 = vmatpush1.bf16.msra.mxu0 0
  %154 = vmatprep.subr.bf16.mxu0 0
  %155 = vmatpush1.bf16.msra.mxu0 0
  %156 = vmatprep.subr.bf16.mxu0 0
  %157 = vmatpush1.bf16.msra.mxu0 0
  %158 = vmatprep.subr.bf16.mxu0 0
  %159 = vmatpush1.bf16.msra.mxu0 0
  %160 = vmatprep.mubr.bf16.mxu0 0
  %161 = vmatmul.mubr.bf16.gmra.mrb[0].mxu0 %v123
  %v162 = vpop.f32.mrb[0].mxu0
  %v163 = vadd.f32 %v94, %v162
  %v164 = vpop.f32.mrb[0].mxu0
  %v165 = vpop.f32.mrb[0].mxu0
  %v166 = vadd.f32 %v99, %v165
  %v167 = vpop.f32.mrb[0].mxu0
  %168 = vmatprep.mubr.bf16.mxu0 0
  %169 = vmatmul.mubr.bf16.gmra.mrb[0].mxu0 %v126
  %v170 = vpop.f32.mrb[0].mxu0
  %v171 = vadd.f32 %v104, %v170
  %v172 = vpop.f32.mrb[0].mxu0
  %v173 = vpop.f32.mrb[0].mxu0
  %v174 = vadd.f32 %v109, %v173
  %v175 = vpop.f32.mrb[0].mxu0
  %176 = vdwg.mxu0
  %177 = vst [vmem:[%s3] sm:$0xff] %v163
  %178 = vst [vmem:[%s3 + $0x8] sm:$0xff] %v166
  %179 = vst [vmem:[%s3 + $0x10] sm:$0xff] %v171
  %180 = vst [vmem:[%s3 + $0x18] sm:$0xff] %v174
  // Predicated region
  $region14: #{encodec_decoder.19} parent=0 // pred_check
    _
  $region15: #{encodec_decoder.19} parent=0 // pred_check_branch
    %182 = sbr.rel (0) target = $region17
  $region16: #{encodec_decoder.19} parent=0 // pred_region
    _
  $region17: #{encodec_decoder.19} parent=0 // pred_fallthru
    _
  // Predicated region
  $region18: #{encodec_decoder.19} parent=0 // pred_check
    _
  $region19: #{encodec_decoder.19} parent=0 // pred_check_branch
    %184 = sbr.rel (0) target = $region21
  $region20: #{encodec_decoder.19} parent=0 // pred_region
    _
  $region21: #{encodec_decoder.19} parent=0 // pred_fallthru
    _

// kernel: encodec_decoder.21
$region0: #{encodec_decoder.21}
  #allocation0 [shape = 'u32[]', space=smem, size = 0x4, offset = 0x4, fixed_abs, tag = 'smem constant byte address 0x4 - core index']
  #allocation1 [shape = 'u32[144,128]{1,0:T(1,128)}', space=vmem, size = 0x12000, scoped, tag = 'internal scratch']
  %s0 = inlined_call_operand.vmem [shape: bf16[48,128], index: 0, kind: input, shape index: {}]
  %s1 = inlined_call_operand.vmem [shape: bf16[8,48], index: 1, kind: input, shape index: {}]
  %s2 = inlined_call_operand.vmem [shape: f32[8,1], index: 2, kind: input, shape index: {}]
  %s3 = inlined_call_operand.vmem [shape: f32[8,128], index: 3, kind: output, shape index: {}]
  %s4 = sld [smem:[#allocation0]]
  $region22: #{encodec_decoder.21} parent=0
    _
  %s6 = ssub.s32 1, %s4
  %s7 = scalar_select 0, %s6, %s4
  // Predicated region
  $region2: #{encodec_decoder.21} parent=0 // pred_check
    _
  $region3: #{encodec_decoder.21} parent=0 // pred_check_branch
    %9 = sbr.rel (0) target = $region5
  $region4: #{encodec_decoder.21} parent=0 // pred_region
    _
  $region5: #{encodec_decoder.21} parent=0 // pred_fallthru
    _
  // Predicated region
  $region6: #{encodec_decoder.21} parent=0 // pred_check
    _
  $region7: #{encodec_decoder.21} parent=0 // pred_check_branch
    %11 = sbr.rel (0) target = $region9
  $region8: #{encodec_decoder.21} parent=0 // pred_region
    _
  $region9: #{encodec_decoder.21} parent=0 // pred_fallthru
    _
  // Predicated region
  $region10: #{encodec_decoder.21} parent=0 // pred_check
    _
  $region11: #{encodec_decoder.21} parent=0 // pred_check_branch
    %13 = sbr.rel (0) target = $region13
  $region12: #{encodec_decoder.21} parent=0 // pred_region
    _
  $region13: #{encodec_decoder.21} parent=0 // pred_fallthru
    _
  %v15 = vld [vmem:[%s0] sm:$0xf]
  %v16 = vld [vmem:[%s0 + $0x4] sm:$0xf]
  %v17 = vld [vmem:[%s0 + $0x8] sm:$0xf]
  %v18 = vld [vmem:[%s0 + $0xc] sm:$0xf]
  %v19 = vld [vmem:[%s0 + $0x10] sm:$0xf]
  %v20 = vld [vmem:[%s0 + $0x14] sm:$0xf]
  %v21 = vunpack.c.l.bf16 %v15
  %v22 = vunpack.c.l.bf16 %v16
  %v23 = vunpack.c.l.bf16 %v17
  %v24 = vunpack.c.l.bf16 %v18
  %v25 = vunpack.c.l.bf16 %v19
  %v26 = vunpack.c.l.bf16 %v20
  %vm27 = vcmp.gt.f32.partialorder %v21, 0.0
  %vm28 = vcmp.gt.f32.partialorder %v22, 0.0
  %vm29 = vcmp.gt.f32.partialorder %v23, 0.0
  %vm30 = vcmp.gt.f32.partialorder %v24, 0.0
  %vm31 = vcmp.gt.f32.partialorder %v25, 0.0
  %vm32 = vcmp.gt.f32.partialorder %v26, 0.0
  %v33 = vmin.f32 %v21, 0.0
  %v34 = vmin.f32 %v22, 0.0
  %v35 = vmin.f32 %v23, 0.0
  %v36 = vmin.f32 %v24, 0.0
  %v37 = vmin.f32 %v25, 0.0
  %v38 = vmin.f32 %v26, 0.0
  %v39 = vmul.f32 %v33, 1.442695
  %v40 = vpow.pop %v39
  %v41 = vmul.f32 %v34, 1.442695
  %v42 = vpow.pop %v41
  %v43 = vmul.f32 %v35, 1.442695
  %v44 = vpow.pop %v43
  %v45 = vmul.f32 %v36, 1.442695
  %v46 = vpow.pop %v45
  %v47 = vmul.f32 %v37, 1.442695
  %v48 = vpow.pop %v47
  %v49 = vmul.f32 %v38, 1.442695
  %v50 = vpow.pop %v49
  %v51 = vsub.f32 %v40, 1.0
  %v52 = vsub.f32 %v42, 1.0
  %v53 = vsub.f32 %v44, 1.0
  %v54 = vsub.f32 %v46, 1.0
  %v55 = vsub.f32 %v48, 1.0
  %v56 = vsub.f32 %v50, 1.0
  %v57 = vsel %vm27, %v21, %v51
  %v58 = vsel %vm28, %v22, %v52
  %v59 = vsel %vm29, %v23, %v53
  %v60 = vsel %vm30, %v24, %v54
  %v61 = vsel %vm31, %v25, %v55
  %v62 = vsel %vm32, %v26, %v56
  %v63 = vpack.c.bf16 %v58, %v57
  %v64 = vpack.c.bf16 %v60, %v59
  %v65 = vpack.c.bf16 %v62, %v61
  %v66 = vld [vmem:[%s1] sm:$0xf]
  %v67 = vld [vmem:[%s2] sm:$0xff]
  %69 = vset.pattern.permute.xlu0 0
  %70 = vperm.xlu0 %69, %v67
  %v71 = vpop.permute.xlu0 %70
  %vm73 = vcmask 392192
  %v75 = vsel %vm73, %v66, 0
  %77 = vmatprep.subr.bf16.mxu0 0
  %78 = vmatpush1.bf16.msra.mxu0 %v63
  %79 = vmatprep.subr.bf16.mxu0 0
  %80 = vmatpush1.bf16.msra.mxu0 %v64
  %81 = vmatprep.subr.bf16.mxu0 0
  %82 = vmatpush1.bf16.msra.mxu0 %v65
  %83 = vmatprep.subr.bf16.mxu0 0
  %84 = vmatpush1.bf16.msra.mxu0 0
  %85 = vmatprep.subr.bf16.mxu0 0
  %86 = vmatpush1.bf16.msra.mxu0 0
  %87 = vmatprep.subr.bf16.mxu0 0
  %88 = vmatpush1.bf16.msra.mxu0 0
  %89 = vmatprep.subr.bf16.mxu0 0
  %90 = vmatpush1.bf16.msra.mxu0 0
  %91 = vmatprep.subr.bf16.mxu0 0
  %92 = vmatpush1.bf16.msra.mxu0 0
  %93 = vmatprep.subr.bf16.mxu0 0
  %94 = vmatpush1.bf16.msra.mxu0 0
  %95 = vmatprep.subr.bf16.mxu0 0
  %96 = vmatpush1.bf16.msra.mxu0 0
  %97 = vmatprep.subr.bf16.mxu0 0
  %98 = vmatpush1.bf16.msra.mxu0 0
  %99 = vmatprep.subr.bf16.mxu0 0
  %100 = vmatpush1.bf16.msra.mxu0 0
  %101 = vmatprep.subr.bf16.mxu0 0
  %102 = vmatpush1.bf16.msra.mxu0 0
  %103 = vmatprep.subr.bf16.mxu0 0
  %104 = vmatpush1.bf16.msra.mxu0 0
  %105 = vmatprep.subr.bf16.mxu0 0
  %106 = vmatpush1.bf16.msra.mxu0 0
  %107 = vmatprep.subr.bf16.mxu0 0
  %108 = vmatpush1.bf16.msra.mxu0 0
  %109 = vmatprep.mubr.bf16.mxu0 0
  %110 = vmatmul.mubr.bf16.gmra.mrb[0].mxu0 %v75
  %v111 = vpop.f32.mrb[0].mxu0
  %v112 = vadd.f32 %v71, %v111
  %v113 = vpop.f32.mrb[0].mxu0
  %v114 = vpop.f32.mrb[0].mxu0
  %v115 = vpop.f32.mrb[0].mxu0
  %116 = vdwg.mxu0
  %117 = vst [vmem:[%s3] sm:$0xff] %v112
  // Predicated region
  $region14: #{encodec_decoder.21} parent=0 // pred_check
    _
  $region15: #{encodec_decoder.21} parent=0 // pred_check_branch
    %119 = sbr.rel (0) target = $region17
  $region16: #{encodec_decoder.21} parent=0 // pred_region
    _
  $region17: #{encodec_decoder.21} parent=0 // pred_fallthru
    _
  // Predicated region
  $region18: #{encodec_decoder.21} parent=0 // pred_check
    _
  $region19: #{encodec_decoder.21} parent=0 // pred_check_branch
    %121 = sbr.rel (0) target = $region21
  $region20: #{encodec_decoder.21} parent=0 // pred_region
    _
  $region21: #{encodec_decoder.21} parent=0 // pred_fallthru
    _

// kernel: encodec_decoder.20
$region0: #{encodec_decoder.20}
  #allocation0 [shape = 'u32[]', space=smem, size = 0x4, offset = 0x4, fixed_abs, tag = 'smem constant byte address 0x4 - core index']
  #allocation1 [shape = 'u32[144,128]{1,0:T(1,128)}', space=vmem, size = 0x12000, scoped, tag = 'internal scratch']
  %s0 = inlined_call_operand.vmem [shape: bf16[16,128], index: 0, kind: input, shape index: {}]
  %s1 = inlined_call_operand.vmem [shape: bf16[16,16], index: 1, kind: input, shape index: {}]
  %s2 = inlined_call_operand.vmem [shape: f32[16,1], index: 2, kind: input, shape index: {}]
  %s3 = inlined_call_operand.vmem [shape: f32[16,128], index: 3, kind: output, shape index: {}]
  %s4 = sld [smem:[#allocation0]]
  $region22: #{encodec_decoder.20} parent=0
    _
  %s6 = ssub.s32 1, %s4
  %s7 = scalar_select 0, %s6, %s4
  // Predicated region
  $region2: #{encodec_decoder.20} parent=0 // pred_check
    _
  $region3: #{encodec_decoder.20} parent=0 // pred_check_branch
    %9 = sbr.rel (0) target = $region5
  $region4: #{encodec_decoder.20} parent=0 // pred_region
    _
  $region5: #{encodec_decoder.20} parent=0 // pred_fallthru
    _
  // Predicated region
  $region6: #{encodec_decoder.20} parent=0 // pred_check
    _
  $region7: #{encodec_decoder.20} parent=0 // pred_check_branch
    %11 = sbr.rel (0) target = $region9
  $region8: #{encodec_decoder.20} parent=0 // pred_region
    _
  $region9: #{encodec_decoder.20} parent=0 // pred_fallthru
    _
  // Predicated region
  $region10: #{encodec_decoder.20} parent=0 // pred_check
    _
  $region11: #{encodec_decoder.20} parent=0 // pred_check_branch
    %13 = sbr.rel (0) target = $region13
  $region12: #{encodec_decoder.20} parent=0 // pred_region
    _
  $region13: #{encodec_decoder.20} parent=0 // pred_fallthru
    _
  %v15 = vld [vmem:[%s0] sm:$0xf]
  %v16 = vld [vmem:[%s0 + $0x4] sm:$0xf]
  %v17 = vld [vmem:[%s1] sm:$0xf]
  %v18 = vld [vmem:[%s1 + $0x4] sm:$0xf]
  %v19 = vld [vmem:[%s2] sm:$0xff]
  %v20 = vld [vmem:[%s2 + $0x8] sm:$0xff]
  %22 = vset.pattern.permute.xlu0 0
  %23 = vperm.xlu0 %22, %v19
  %v24 = vpop.permute.xlu0 %23
  %27 = vset.pattern.permute.xlu0 0
  %28 = vperm.xlu0 %27, %v20
  %v29 = vpop.permute.xlu0 %28
  %v33 = vunpack.c.l.b16 %v17
  %v34 = vunpack.c.l.b16 %v18
  %v35 = vpack.c.b16 %v34, %v33
  %v38 = vunpack.c.l.b16 %v15
  %v39 = vunpack.c.l.b16 %v16
  %v40 = vpack.c.b16 %v39, %v38
  %vm42 = vcmask 130048
  %v44 = vsel %vm42, %v35, 0
  %46 = vmatprep.subr.bf16.mxu0 0
  %47 = vmatpush1.bf16.msra.mxu0 %v40
  %48 = vmatprep.subr.bf16.mxu0 0
  %49 = vmatpush1.bf16.msra.mxu0 0
  %50 = vmatprep.subr.bf16.mxu0 0
  %51 = vmatpush1.bf16.msra.mxu0 0
  %52 = vmatprep.subr.bf16.mxu0 0
  %53 = vmatpush1.bf16.msra.mxu0 0
  %54 = vmatprep.subr.bf16.mxu0 0
  %55 = vmatpush1.bf16.msra.mxu0 0
  %56 = vmatprep.subr.bf16.mxu0 0
  %57 = vmatpush1.bf16.msra.mxu0 0
  %58 = vmatprep.subr.bf16.mxu0 0
  %59 = vmatpush1.bf16.msra.mxu0 0
  %60 = vmatprep.subr.bf16.mxu0 0
  %61 = vmatpush1.bf16.msra.mxu0 0
  %62 = vmatprep.subr.bf16.mxu0 0
  %63 = vmatpush1.bf16.msra.mxu0 0
  %64 = vmatprep.subr.bf16.mxu0 0
  %65 = vmatpush1.bf16.msra.mxu0 0
  %66 = vmatprep.subr.bf16.mxu0 0
  %67 = vmatpush1.bf16.msra.mxu0 0
  %68 = vmatprep.subr.bf16.mxu0 0
  %69 = vmatpush1.bf16.msra.mxu0 0
  %70 = vmatprep.subr.bf16.mxu0 0
  %71 = vmatpush1.bf16.msra.mxu0 0
  %72 = vmatprep.subr.bf16.mxu0 0
  %73 = vmatpush1.bf16.msra.mxu0 0
  %74 = vmatprep.subr.bf16.mxu0 0
  %75 = vmatpush1.bf16.msra.mxu0 0
  %76 = vmatprep.subr.bf16.mxu0 0
  %77 = vmatpush1.bf16.msra.mxu0 0
  %78 = vmatprep.mubr.bf16.mxu0 0
  %79 = vmatmul.mubr.bf16.gmra.mrb[0].mxu0 %v44
  %v80 = vpop.f32.mrb[0].mxu0
  %v81 = vadd.f32 %v24, %v80
  %v82 = vpop.f32.mrb[0].mxu0
  %v83 = vpop.f32.mrb[0].mxu0
  %v84 = vadd.f32 %v29, %v83
  %v85 = vpop.f32.mrb[0].mxu0
  %86 = vdwg.mxu0
  %87 = vst [vmem:[%s3] sm:$0xff] %v81
  %88 = vst [vmem:[%s3 + $0x8] sm:$0xff] %v84
  // Predicated region
  $region14: #{encodec_decoder.20} parent=0 // pred_check
    _
  $region15: #{encodec_decoder.20} parent=0 // pred_check_branch
    %90 = sbr.rel (0) target = $region17
  $region16: #{encodec_decoder.20} parent=0 // pred_region
    _
  $region17: #{encodec_decoder.20} parent=0 // pred_fallthru
    _
  // Predicated region
  $region18: #{encodec_decoder.20} parent=0 // pred_check
    _
  $region19: #{encodec_decoder.20} parent=0 // pred_check_branch
    %92 = sbr.rel (0) target = $region21
  $region20: #{encodec_decoder.20} parent=0 // pred_region
    _
  $region21: #{encodec_decoder.20} parent=0 // pred_fallthru
    _

// kernel: encodec_decoder.22
$region0: #{encodec_decoder.22}
  #allocation0 [shape = 'u32[]', space=smem, size = 0x4, offset = 0x4, fixed_abs, tag = 'smem constant byte address 0x4 - core index']
  #allocation1 [shape = 'u32[144,128]{1,0:T(1,128)}', space=vmem, size = 0x12000, scoped, tag = 'internal scratch']
  %s0 = inlined_call_operand.vmem [shape: bf16[8,128], index: 0, kind: input, shape index: {}]
  %s1 = inlined_call_operand.vmem [shape: bf16[16,8], index: 1, kind: input, shape index: {}]
  %s2 = inlined_call_operand.vmem [shape: f32[16,1], index: 2, kind: input, shape index: {}]
  %s3 = inlined_call_operand.vmem [shape: f32[16,128], index: 3, kind: input, shape index: {}]
  %s4 = inlined_call_operand.vmem [shape: f32[16,128], index: 4, kind: output, shape index: {}]
  %s5 = sld [smem:[#allocation0]]
  $region26: #{encodec_decoder.22} parent=0
    _
  %s7 = ssub.s32 1, %s5
  %s8 = scalar_select 0, %s7, %s5
  // Predicated region
  $region2: #{encodec_decoder.22} parent=0 // pred_check
    _
  $region3: #{encodec_decoder.22} parent=0 // pred_check_branch
    %10 = sbr.rel (0) target = $region5
  $region4: #{encodec_decoder.22} parent=0 // pred_region
    _
  $region5: #{encodec_decoder.22} parent=0 // pred_fallthru
    _
  // Predicated region
  $region6: #{encodec_decoder.22} parent=0 // pred_check
    _
  $region7: #{encodec_decoder.22} parent=0 // pred_check_branch
    %12 = sbr.rel (0) target = $region9
  $region8: #{encodec_decoder.22} parent=0 // pred_region
    _
  $region9: #{encodec_decoder.22} parent=0 // pred_fallthru
    _
  // Predicated region
  $region10: #{encodec_decoder.22} parent=0 // pred_check
    _
  $region11: #{encodec_decoder.22} parent=0 // pred_check_branch
    %14 = sbr.rel (0) target = $region13
  $region12: #{encodec_decoder.22} parent=0 // pred_region
    _
  $region13: #{encodec_decoder.22} parent=0 // pred_fallthru
    _
  // Predicated region
  $region14: #{encodec_decoder.22} parent=0 // pred_check
    _
  $region15: #{encodec_decoder.22} parent=0 // pred_check_branch
    %16 = sbr.rel (0) target = $region17
  $region16: #{encodec_decoder.22} parent=0 // pred_region
    _
  $region17: #{encodec_decoder.22} parent=0 // pred_fallthru
    _
  %v18 = vld [vmem:[%s0] sm:$0xf]
  %v19 = vunpack.c.l.bf16 %v18
  %vm20 = vcmp.gt.f32.partialorder %v19, 0.0
  %v21 = vmin.f32 %v19, 0.0
  %v22 = vmul.f32 %v21, 1.442695
  %v23 = vpow.pop %v22
  %v24 = vsub.f32 %v23, 1.0
  %v25 = vsel %vm20, %v19, %v24
  %v26 = vpack.c.bf16 %v25, %v25
  %v27 = vld [vmem:[%s1] sm:$0xf]
  %v28 = vld [vmem:[%s1 + $0x4] sm:$0xf]
  %v29 = vld [vmem:[%s2] sm:$0xff]
  %v30 = vld [vmem:[%s2 + $0x8] sm:$0xff]
  %32 = vset.pattern.permute.xlu0 0
  %33 = vperm.xlu0 %32, %v29
  %v34 = vpop.permute.xlu0 %33
  %37 = vset.pattern.permute.xlu0 0
  %38 = vperm.xlu0 %37, %v30
  %v39 = vpop.permute.xlu0 %38
  %v43 = vunpack.c.l.b16 %v27
  %v44 = vunpack.c.l.b16 %v28
  %v45 = vpack.c.b16 %v44, %v43
  %vm46 = vcmask 64512
  %v48 = vsel %vm46, %v45, 0
  %vm50 = vcmask 1043456
  %v52 = vsel %vm50, %v26, 0
  %54 = vmatprep.subr.bf16.mxu0 0
  %55 = vmatpush1.bf16.msra.mxu0 %v52
  %56 = vmatprep.subr.bf16.mxu0 0
  %57 = vmatpush1.bf16.msra.mxu0 0
  %58 = vmatprep.subr.bf16.mxu0 0
  %59 = vmatpush1.bf16.msra.mxu0 0
  %60 = vmatprep.subr.bf16.mxu0 0
  %61 = vmatpush1.bf16.msra.mxu0 0
  %62 = vmatprep.subr.bf16.mxu0 0
  %63 = vmatpush1.bf16.msra.mxu0 0
  %64 = vmatprep.subr.bf16.mxu0 0
  %65 = vmatpush1.bf16.msra.mxu0 0
  %66 = vmatprep.subr.bf16.mxu0 0
  %67 = vmatpush1.bf16.msra.mxu0 0
  %68 = vmatprep.subr.bf16.mxu0 0
  %69 = vmatpush1.bf16.msra.mxu0 0
  %70 = vmatprep.subr.bf16.mxu0 0
  %71 = vmatpush1.bf16.msra.mxu0 0
  %72 = vmatprep.subr.bf16.mxu0 0
  %73 = vmatpush1.bf16.msra.mxu0 0
  %74 = vmatprep.subr.bf16.mxu0 0
  %75 = vmatpush1.bf16.msra.mxu0 0
  %76 = vmatprep.subr.bf16.mxu0 0
  %77 = vmatpush1.bf16.msra.mxu0 0
  %78 = vmatprep.subr.bf16.mxu0 0
  %79 = vmatpush1.bf16.msra.mxu0 0
  %80 = vmatprep.subr.bf16.mxu0 0
  %81 = vmatpush1.bf16.msra.mxu0 0
  %82 = vmatprep.subr.bf16.mxu0 0
  %83 = vmatpush1.bf16.msra.mxu0 0
  %84 = vmatprep.subr.bf16.mxu0 0
  %85 = vmatpush1.bf16.msra.mxu0 0
  %86 = vmatprep.mubr.bf16.mxu0 0
  %87 = vmatmul.mubr.bf16.gmra.mrb[0].mxu0 %v48
  %v88 = vpop.f32.mrb[0].mxu0
  %v89 = vadd.f32 %v34, %v88
  %v90 = vpop.f32.mrb[0].mxu0
  %v91 = vpop.f32.mrb[0].mxu0
  %v92 = vadd.f32 %v39, %v91
  %v93 = vpop.f32.mrb[0].mxu0
  %94 = vdwg.mxu0
  %v95 = vld [vmem:[%s3] sm:$0xff]
  %v96 = vld [vmem:[%s3 + $0x8] sm:$0xff]
  %v97 = vadd.f32 %v89, %v95
  %v98 = vadd.f32 %v92, %v96
  %99 = vst [vmem:[%s4] sm:$0xff] %v97
  %100 = vst [vmem:[%s4 + $0x8] sm:$0xff] %v98
  // Predicated region
  $region18: #{encodec_decoder.22} parent=0 // pred_check
    _
  $region19: #{encodec_decoder.22} parent=0 // pred_check_branch
    %102 = sbr.rel (0) target = $region21
  $region20: #{encodec_decoder.22} parent=0 // pred_region
    _
  $region21: #{encodec_decoder.22} parent=0 // pred_fallthru
    _
  // Predicated region
  $region22: #{encodec_decoder.22} parent=0 // pred_check
    _
  $region23: #{encodec_decoder.22} parent=0 // pred_check_branch
    %104 = sbr.rel (0) target = $region25
  $region24: #{encodec_decoder.22} parent=0 // pred_region
    _
  $region25: #{encodec_decoder.22} parent=0 // pred_fallthru
    _

// kernel: encodec_decoder.23
$region0: #{encodec_decoder.23}
  #allocation0 [shape = 'u32[]', space=smem, size = 0x4, offset = 0x4, fixed_abs, tag = 'smem constant byte address 0x4 - core index']
  #allocation1 [shape = 'u32[144,128]{1,0:T(1,128)}', space=vmem, size = 0x12000, scoped, tag = 'internal scratch']
  %s0 = inlined_call_operand.vmem [shape: bf16[32,128], index: 0, kind: input, shape index: {}]
  %s1 = inlined_call_operand.vmem [shape: bf16[16,32], index: 1, kind: input, shape index: {}]
  %s2 = inlined_call_operand.vmem [shape: f32[16,1], index: 2, kind: input, shape index: {}]
  %s3 = inlined_call_operand.vmem [shape: f32[16,128], index: 3, kind: output, shape index: {}]
  %s4 = sld [smem:[#allocation0]]
  $region22: #{encodec_decoder.23} parent=0
    _
  %s6 = ssub.s32 1, %s4
  %s7 = scalar_select 0, %s6, %s4
  // Predicated region
  $region2: #{encodec_decoder.23} parent=0 // pred_check
    _
  $region3: #{encodec_decoder.23} parent=0 // pred_check_branch
    %9 = sbr.rel (0) target = $region5
  $region4: #{encodec_decoder.23} parent=0 // pred_region
    _
  $region5: #{encodec_decoder.23} parent=0 // pred_fallthru
    _
  // Predicated region
  $region6: #{encodec_decoder.23} parent=0 // pred_check
    _
  $region7: #{encodec_decoder.23} parent=0 // pred_check_branch
    %11 = sbr.rel (0) target = $region9
  $region8: #{encodec_decoder.23} parent=0 // pred_region
    _
  $region9: #{encodec_decoder.23} parent=0 // pred_fallthru
    _
  // Predicated region
  $region10: #{encodec_decoder.23} parent=0 // pred_check
    _
  $region11: #{encodec_decoder.23} parent=0 // pred_check_branch
    %13 = sbr.rel (0) target = $region13
  $region12: #{encodec_decoder.23} parent=0 // pred_region
    _
  $region13: #{encodec_decoder.23} parent=0 // pred_fallthru
    _
  %v15 = vld [vmem:[%s0] sm:$0xf]
  %v16 = vld [vmem:[%s0 + $0x4] sm:$0xf]
  %v17 = vld [vmem:[%s0 + $0x8] sm:$0xf]
  %v18 = vld [vmem:[%s0 + $0xc] sm:$0xf]
  %v19 = vunpack.c.l.bf16 %v15
  %v20 = vunpack.c.l.bf16 %v16
  %v21 = vunpack.c.l.bf16 %v17
  %v22 = vunpack.c.l.bf16 %v18
  %vm23 = vcmp.gt.f32.partialorder %v19, 0.0
  %vm24 = vcmp.gt.f32.partialorder %v20, 0.0
  %vm25 = vcmp.gt.f32.partialorder %v21, 0.0
  %vm26 = vcmp.gt.f32.partialorder %v22, 0.0
  %v27 = vmin.f32 %v19, 0.0
  %v28 = vmin.f32 %v20, 0.0
  %v29 = vmin.f32 %v21, 0.0
  %v30 = vmin.f32 %v22, 0.0
  %v31 = vmul.f32 %v27, 1.442695
  %v32 = vpow.pop %v31
  %v33 = vmul.f32 %v28, 1.442695
  %v34 = vpow.pop %v33
  %v35 = vmul.f32 %v29, 1.442695
  %v36 = vpow.pop %v35
  %v37 = vmul.f32 %v30, 1.442695
  %v38 = vpow.pop %v37
  %v39 = vsub.f32 %v32, 1.0
  %v40 = vsub.f32 %v34, 1.0
  %v41 = vsub.f32 %v36, 1.0
  %v42 = vsub.f32 %v38, 1.0
  %v43 = vsel %vm23, %v19, %v39
  %v44 = vsel %vm24, %v20, %v40
  %v45 = vsel %vm25, %v21, %v41
  %v46 = vsel %vm26, %v22, %v42
  %v47 = vpack.c.bf16 %v44, %v43
  %v48 = vpack.c.bf16 %v46, %v45
  %v49 = vld [vmem:[%s1] sm:$0xf]
  %v50 = vld [vmem:[%s1 + $0x4] sm:$0xf]
  %v51 = vld [vmem:[%s2] sm:$0xff]
  %v52 = vld [vmem:[%s2 + $0x8] sm:$0xff]
  %54 = vset.pattern.permute.xlu0 0
  %55 = vperm.xlu0 %54, %v51
  %v56 = vpop.permute.xlu0 %55
  %59 = vset.pattern.permute.xlu0 0
  %60 = vperm.xlu0 %59, %v52
  %v61 = vpop.permute.xlu0 %60
  %v65 = vunpack.c.l.b16 %v49
  %v66 = vunpack.c.l.b16 %v50
  %v67 = vpack.c.b16 %v66, %v65
  %vm68 = vcmask 261120
  %v70 = vsel %vm68, %v67, 0
  %72 = vmatprep.subr.bf16.mxu0 0
  %73 = vmatpush1.bf16.msra.mxu0 %v47
  %74 = vmatprep.subr.bf16.mxu0 0
  %75 = vmatpush1.bf16.msra.mxu0 %v48
  %76 = vmatprep.subr.bf16.mxu0 0
  %77 = vmatpush1.bf16.msra.mxu0 0
  %78 = vmatprep.subr.bf16.mxu0 0
  %79 = vmatpush1.bf16.msra.mxu0 0
  %80 = vmatprep.subr.bf16.mxu0 0
  %81 = vmatpush1.bf16.msra.mxu0 0
  %82 = vmatprep.subr.bf16.mxu0 0
  %83 = vmatpush1.bf16.msra.mxu0 0
  %84 = vmatprep.subr.bf16.mxu0 0
  %85 = vmatpush1.bf16.msra.mxu0 0
  %86 = vmatprep.subr.bf16.mxu0 0
  %87 = vmatpush1.bf16.msra.mxu0 0
  %88 = vmatprep.subr.bf16.mxu0 0
  %89 = vmatpush1.bf16.msra.mxu0 0
  %90 = vmatprep.subr.bf16.mxu0 0
  %91 = vmatpush1.bf16.msra.mxu0 0
  %92 = vmatprep.subr.bf16.mxu0 0
  %93 = vmatpush1.bf16.msra.mxu0 0
  %94 = vmatprep.subr.bf16.mxu0 0
  %95 = vmatpush1.bf16.msra.mxu0 0
  %96 = vmatprep.subr.bf16.mxu0 0
  %97 = vmatpush1.bf16.msra.mxu0 0
  %98 = vmatprep.subr.bf16.mxu0 0
  %99 = vmatpush1.bf16.msra.mxu0 0
  %100 = vmatprep.subr.bf16.mxu0 0
  %101 = vmatpush1.bf16.msra.mxu0 0
  %102 = vmatprep.subr.bf16.mxu0 0
  %103 = vmatpush1.bf16.msra.mxu0 0
  %104 = vmatprep.mubr.bf16.mxu0 0
  %105 = vmatmul.mubr.bf16.gmra.mrb[0].mxu0 %v70
  %v106 = vpop.f32.mrb[0].mxu0
  %v107 = vadd.f32 %v56, %v106
  %v108 = vpop.f32.mrb[0].mxu0
  %v109 = vpop.f32.mrb[0].mxu0
  %v110 = vadd.f32 %v61, %v109
  %v111 = vpop.f32.mrb[0].mxu0
  %112 = vdwg.mxu0
  %113 = vst [vmem:[%s3] sm:$0xff] %v107
  %114 = vst [vmem:[%s3 + $0x8] sm:$0xff] %v110
  // Predicated region
  $region14: #{encodec_decoder.23} parent=0 // pred_check
    _
  $region15: #{encodec_decoder.23} parent=0 // pred_check_branch
    %116 = sbr.rel (0) target = $region17
  $region16: #{encodec_decoder.23} parent=0 // pred_region
    _
  $region17: #{encodec_decoder.23} parent=0 // pred_fallthru
    _
  // Predicated region
  $region18: #{encodec_decoder.23} parent=0 // pred_check
    _
  $region19: #{encodec_decoder.23} parent=0 // pred_check_branch
    %118 = sbr.rel (0) target = $region21
  $region20: #{encodec_decoder.23} parent=0 // pred_region
    _
  $region21: #{encodec_decoder.23} parent=0 // pred_fallthru
    _

// kernel: encodec_decoder.25
$region0: #{encodec_decoder.25}
  #allocation0 [shape = 'u32[]', space=smem, size = 0x4, offset = 0x4, fixed_abs, tag = 'smem constant byte address 0x4 - core index']
  #allocation1 [shape = 'u32[144,128]{1,0:T(1,128)}', space=vmem, size = 0x12000, scoped, tag = 'internal scratch']
  %s0 = inlined_call_operand.vmem [shape: bf16[24,128], index: 0, kind: input, shape index: {}]
  %s1 = inlined_call_operand.vmem [shape: bf16[8,24], index: 1, kind: input, shape index: {}]
  %s2 = inlined_call_operand.vmem [shape: f32[8,1], index: 2, kind: input, shape index: {}]
  %s3 = inlined_call_operand.vmem [shape: f32[8,128], index: 3, kind: output, shape index: {}]
  %s4 = sld [smem:[#allocation0]]
  $region22: #{encodec_decoder.25} parent=0
    _
  %s6 = ssub.s32 1, %s4
  %s7 = scalar_select 0, %s6, %s4
  // Predicated region
  $region2: #{encodec_decoder.25} parent=0 // pred_check
    _
  $region3: #{encodec_decoder.25} parent=0 // pred_check_branch
    %9 = sbr.rel (0) target = $region5
  $region4: #{encodec_decoder.25} parent=0 // pred_region
    _
  $region5: #{encodec_decoder.25} parent=0 // pred_fallthru
    _
  // Predicated region
  $region6: #{encodec_decoder.25} parent=0 // pred_check
    _
  $region7: #{encodec_decoder.25} parent=0 // pred_check_branch
    %11 = sbr.rel (0) target = $region9
  $region8: #{encodec_decoder.25} parent=0 // pred_region
    _
  $region9: #{encodec_decoder.25} parent=0 // pred_fallthru
    _
  // Predicated region
  $region10: #{encodec_decoder.25} parent=0 // pred_check
    _
  $region11: #{encodec_decoder.25} parent=0 // pred_check_branch
    %13 = sbr.rel (0) target = $region13
  $region12: #{encodec_decoder.25} parent=0 // pred_region
    _
  $region13: #{encodec_decoder.25} parent=0 // pred_fallthru
    _
  %v15 = vld [vmem:[%s0] sm:$0xf]
  %v16 = vld [vmem:[%s0 + $0x4] sm:$0xf]
  %v17 = vld [vmem:[%s0 + $0x8] sm:$0xf]
  %v18 = vunpack.c.l.bf16 %v15
  %v19 = vunpack.c.l.bf16 %v16
  %v20 = vunpack.c.l.bf16 %v17
  %vm21 = vcmp.gt.f32.partialorder %v18, 0.0
  %vm22 = vcmp.gt.f32.partialorder %v19, 0.0
  %vm23 = vcmp.gt.f32.partialorder %v20, 0.0
  %v24 = vmin.f32 %v18, 0.0
  %v25 = vmin.f32 %v19, 0.0
  %v26 = vmin.f32 %v20, 0.0
  %v27 = vmul.f32 %v24, 1.442695
  %v28 = vpow.pop %v27
  %v29 = vmul.f32 %v25, 1.442695
  %v30 = vpow.pop %v29
  %v31 = vmul.f32 %v26, 1.442695
  %v32 = vpow.pop %v31
  %v33 = vsub.f32 %v28, 1.0
  %v34 = vsub.f32 %v30, 1.0
  %v35 = vsub.f32 %v32, 1.0
  %v36 = vsel %vm21, %v18, %v33
  %v37 = vsel %vm22, %v19, %v34
  %v38 = vsel %vm23, %v20, %v35
  %v39 = vpack.c.bf16 %v37, %v36
  %v40 = vpack.c.bf16 %v38, %v38
  %v41 = vld [vmem:[%s1] sm:$0xf]
  %v42 = vld [vmem:[%s2] sm:$0xff]
  %44 = vset.pattern.permute.xlu0 0
  %45 = vperm.xlu0 %44, %v42
  %v46 = vpop.permute.xlu0 %45
  %vm48 = vcmask 195584
  %v50 = vsel %vm48, %v41, 0
  %vm52 = vcmask 1043456
  %v54 = vsel %vm52, %v40, 0
  %56 = vmatprep.subr.bf16.mxu0 0
  %57 = vmatpush1.bf16.msra.mxu0 %v39
  %58 = vmatprep.subr.bf16.mxu0 0
  %59 = vmatpush1.bf16.msra.mxu0 %v54
  %60 = vmatprep.subr.bf16.mxu0 0
  %61 = vmatpush1.bf16.msra.mxu0 0
  %62 = vmatprep.subr.bf16.mxu0 0
  %63 = vmatpush1.bf16.msra.mxu0 0
  %64 = vmatprep.subr.bf16.mxu0 0
  %65 = vmatpush1.bf16.msra.mxu0 0
  %66 = vmatprep.subr.bf16.mxu0 0
  %67 = vmatpush1.bf16.msra.mxu0 0
  %68 = vmatprep.subr.bf16.mxu0 0
  %69 = vmatpush1.bf16.msra.mxu0 0
  %70 = vmatprep.subr.bf16.mxu0 0
  %71 = vmatpush1.bf16.msra.mxu0 0
  %72 = vmatprep.subr.bf16.mxu0 0
  %73 = vmatpush1.bf16.msra.mxu0 0
  %74 = vmatprep.subr.bf16.mxu0 0
  %75 = vmatpush1.bf16.msra.mxu0 0
  %76 = vmatprep.subr.bf16.mxu0 0
  %77 = vmatpush1.bf16.msra.mxu0 0
  %78 = vmatprep.subr.bf16.mxu0 0
  %79 = vmatpush1.bf16.msra.mxu0 0
  %80 = vmatprep.subr.bf16.mxu0 0
  %81 = vmatpush1.bf16.msra.mxu0 0
  %82 = vmatprep.subr.bf16.mxu0 0
  %83 = vmatpush1.bf16.msra.mxu0 0
  %84 = vmatprep.subr.bf16.mxu0 0
  %85 = vmatpush1.bf16.msra.mxu0 0
  %86 = vmatprep.subr.bf16.mxu0 0
  %87 = vmatpush1.bf16.msra.mxu0 0
  %88 = vmatprep.mubr.bf16.mxu0 0
  %89 = vmatmul.mubr.bf16.gmra.mrb[0].mxu0 %v50
  %v90 = vpop.f32.mrb[0].mxu0
  %v91 = vadd.f32 %v46, %v90
  %v92 = vpop.f32.mrb[0].mxu0
  %v93 = vpop.f32.mrb[0].mxu0
  %v94 = vpop.f32.mrb[0].mxu0
  %95 = vdwg.mxu0
  %96 = vst [vmem:[%s3] sm:$0xff] %v91
  // Predicated region
  $region14: #{encodec_decoder.25} parent=0 // pred_check
    _
  $region15: #{encodec_decoder.25} parent=0 // pred_check_branch
    %98 = sbr.rel (0) target = $region17
  $region16: #{encodec_decoder.25} parent=0 // pred_region
    _
  $region17: #{encodec_decoder.25} parent=0 // pred_fallthru
    _
  // Predicated region
  $region18: #{encodec_decoder.25} parent=0 // pred_check
    _
  $region19: #{encodec_decoder.25} parent=0 // pred_check_branch
    %100 = sbr.rel (0) target = $region21
  $region20: #{encodec_decoder.25} parent=0 // pred_region
    _
  $region21: #{encodec_decoder.25} parent=0 // pred_fallthru
    _

// kernel: encodec_decoder.24
$region0: #{encodec_decoder.24}
  #allocation0 [shape = 'u32[]', space=smem, size = 0x4, offset = 0x4, fixed_abs, tag = 'smem constant byte address 0x4 - core index']
  #allocation1 [shape = 'u32[144,128]{1,0:T(1,128)}', space=vmem, size = 0x12000, scoped, tag = 'internal scratch']
  %s0 = inlined_call_operand.vmem [shape: bf16[8,128], index: 0, kind: input, shape index: {}]
  %s1 = inlined_call_operand.vmem [shape: bf16[8,8], index: 1, kind: input, shape index: {}]
  %s2 = inlined_call_operand.vmem [shape: f32[8,1], index: 2, kind: input, shape index: {}]
  %s3 = inlined_call_operand.vmem [shape: f32[8,128], index: 3, kind: output, shape index: {}]
  %s4 = sld [smem:[#allocation0]]
  $region22: #{encodec_decoder.24} parent=0
    _
  %s6 = ssub.s32 1, %s4
  %s7 = scalar_select 0, %s6, %s4
  // Predicated region
  $region2: #{encodec_decoder.24} parent=0 // pred_check
    _
  $region3: #{encodec_decoder.24} parent=0 // pred_check_branch
    %9 = sbr.rel (0) target = $region5
  $region4: #{encodec_decoder.24} parent=0 // pred_region
    _
  $region5: #{encodec_decoder.24} parent=0 // pred_fallthru
    _
  // Predicated region
  $region6: #{encodec_decoder.24} parent=0 // pred_check
    _
  $region7: #{encodec_decoder.24} parent=0 // pred_check_branch
    %11 = sbr.rel (0) target = $region9
  $region8: #{encodec_decoder.24} parent=0 // pred_region
    _
  $region9: #{encodec_decoder.24} parent=0 // pred_fallthru
    _
  // Predicated region
  $region10: #{encodec_decoder.24} parent=0 // pred_check
    _
  $region11: #{encodec_decoder.24} parent=0 // pred_check_branch
    %13 = sbr.rel (0) target = $region13
  $region12: #{encodec_decoder.24} parent=0 // pred_region
    _
  $region13: #{encodec_decoder.24} parent=0 // pred_fallthru
    _
  %v15 = vld [vmem:[%s0] sm:$0xf]
  %v16 = vld [vmem:[%s1] sm:$0xf]
  %v17 = vld [vmem:[%s2] sm:$0xff]
  %19 = vset.pattern.permute.xlu0 0
  %20 = vperm.xlu0 %19, %v17
  %v21 = vpop.permute.xlu0 %20
  %vm23 = vcmask 64512
  %v25 = vsel %vm23, %v16, 0
  %vm27 = vcmask 1043456
  %v29 = vsel %vm27, %v15, 0
  %31 = vmatprep.subr.bf16.mxu0 0
  %32 = vmatpush1.bf16.msra.mxu0 %v29
  %33 = vmatprep.subr.bf16.mxu0 0
  %34 = vmatpush1.bf16.msra.mxu0 0
  %35 = vmatprep.subr.bf16.mxu0 0
  %36 = vmatpush1.bf16.msra.mxu0 0
  %37 = vmatprep.subr.bf16.mxu0 0
  %38 = vmatpush1.bf16.msra.mxu0 0
  %39 = vmatprep.subr.bf16.mxu0 0
  %40 = vmatpush1.bf16.msra.mxu0 0
  %41 = vmatprep.subr.bf16.mxu0 0
  %42 = vmatpush1.bf16.msra.mxu0 0
  %43 = vmatprep.subr.bf16.mxu0 0
  %44 = vmatpush1.bf16.msra.mxu0 0
  %45 = vmatprep.subr.bf16.mxu0 0
  %46 = vmatpush1.bf16.msra.mxu0 0
  %47 = vmatprep.subr.bf16.mxu0 0
  %48 = vmatpush1.bf16.msra.mxu0 0
  %49 = vmatprep.subr.bf16.mxu0 0
  %50 = vmatpush1.bf16.msra.mxu0 0
  %51 = vmatprep.subr.bf16.mxu0 0
  %52 = vmatpush1.bf16.msra.mxu0 0
  %53 = vmatprep.subr.bf16.mxu0 0
  %54 = vmatpush1.bf16.msra.mxu0 0
  %55 = vmatprep.subr.bf16.mxu0 0
  %56 = vmatpush1.bf16.msra.mxu0 0
  %57 = vmatprep.subr.bf16.mxu0 0
  %58 = vmatpush1.bf16.msra.mxu0 0
  %59 = vmatprep.subr.bf16.mxu0 0
  %60 = vmatpush1.bf16.msra.mxu0 0
  %61 = vmatprep.subr.bf16.mxu0 0
  %62 = vmatpush1.bf16.msra.mxu0 0
  %63 = vmatprep.mubr.bf16.mxu0 0
  %64 = vmatmul.mubr.bf16.gmra.mrb[0].mxu0 %v25
  %v65 = vpop.f32.mrb[0].mxu0
  %v66 = vadd.f32 %v21, %v65
  %v67 = vpop.f32.mrb[0].mxu0
  %v68 = vpop.f32.mrb[0].mxu0
  %v69 = vpop.f32.mrb[0].mxu0
  %70 = vdwg.mxu0
  %71 = vst [vmem:[%s3] sm:$0xff] %v66
  // Predicated region
  $region14: #{encodec_decoder.24} parent=0 // pred_check
    _
  $region15: #{encodec_decoder.24} parent=0 // pred_check_branch
    %73 = sbr.rel (0) target = $region17
  $region16: #{encodec_decoder.24} parent=0 // pred_region
    _
  $region17: #{encodec_decoder.24} parent=0 // pred_fallthru
    _
  // Predicated region
  $region18: #{encodec_decoder.24} parent=0 // pred_check
    _
  $region19: #{encodec_decoder.24} parent=0 // pred_check_branch
    %75 = sbr.rel (0) target = $region21
  $region20: #{encodec_decoder.24} parent=0 // pred_region
    _
  $region21: #{encodec_decoder.24} parent=0 // pred_fallthru
    _

// kernel: encodec_decoder.26
$region0: #{encodec_decoder.26}
  #allocation0 [shape = 'u32[]', space=smem, size = 0x4, offset = 0x4, fixed_abs, tag = 'smem constant byte address 0x4 - core index']
  #allocation1 [shape = 'u32[144,128]{1,0:T(1,128)}', space=vmem, size = 0x12000, scoped, tag = 'internal scratch']
  %s0 = inlined_call_operand.vmem [shape: bf16[8,128], index: 0, kind: input, shape index: {}]
  %s1 = inlined_call_operand.vmem [shape: bf16[8,8], index: 1, kind: input, shape index: {}]
  %s2 = inlined_call_operand.vmem [shape: f32[8,1], index: 2, kind: input, shape index: {}]
  %s3 = inlined_call_operand.vmem [shape: f32[8,128], index: 3, kind: input, shape index: {}]
  %s4 = inlined_call_operand.vmem [shape: f32[8,128], index: 4, kind: output, shape index: {}]
  %s5 = sld [smem:[#allocation0]]
  $region26: #{encodec_decoder.26} parent=0
    _
  %s7 = ssub.s32 1, %s5
  %s8 = scalar_select 0, %s7, %s5
  // Predicated region
  $region2: #{encodec_decoder.26} parent=0 // pred_check
    _
  $region3: #{encodec_decoder.26} parent=0 // pred_check_branch
    %10 = sbr.rel (0) target = $region5
  $region4: #{encodec_decoder.26} parent=0 // pred_region
    _
  $region5: #{encodec_decoder.26} parent=0 // pred_fallthru
    _
  // Predicated region
  $region6: #{encodec_decoder.26} parent=0 // pred_check
    _
  $region7: #{encodec_decoder.26} parent=0 // pred_check_branch
    %12 = sbr.rel (0) target = $region9
  $region8: #{encodec_decoder.26} parent=0 // pred_region
    _
  $region9: #{encodec_decoder.26} parent=0 // pred_fallthru
    _
  // Predicated region
  $region10: #{encodec_decoder.26} parent=0 // pred_check
    _
  $region11: #{encodec_decoder.26} parent=0 // pred_check_branch
    %14 = sbr.rel (0) target = $region13
  $region12: #{encodec_decoder.26} parent=0 // pred_region
    _
  $region13: #{encodec_decoder.26} parent=0 // pred_fallthru
    _
  // Predicated region
  $region14: #{encodec_decoder.26} parent=0 // pred_check
    _
  $region15: #{encodec_decoder.26} parent=0 // pred_check_branch
    %16 = sbr.rel (0) target = $region17
  $region16: #{encodec_decoder.26} parent=0 // pred_region
    _
  $region17: #{encodec_decoder.26} parent=0 // pred_fallthru
    _
  %v18 = vld [vmem:[%s0] sm:$0xf]
  %v19 = vunpack.c.l.bf16 %v18
  %vm20 = vcmp.gt.f32.partialorder %v19, 0.0
  %v21 = vmin.f32 %v19, 0.0
  %v22 = vmul.f32 %v21, 1.442695
  %v23 = vpow.pop %v22
  %v24 = vsub.f32 %v23, 1.0
  %v25 = vsel %vm20, %v19, %v24
  %v26 = vpack.c.bf16 %v25, %v25
  %v27 = vld [vmem:[%s1] sm:$0xf]
  %v28 = vld [vmem:[%s2] sm:$0xff]
  %30 = vset.pattern.permute.xlu0 0
  %31 = vperm.xlu0 %30, %v28
  %v32 = vpop.permute.xlu0 %31
  %vm34 = vcmask 64512
  %v36 = vsel %vm34, %v27, 0
  %vm38 = vcmask 1043456
  %v40 = vsel %vm38, %v26, 0
  %42 = vmatprep.subr.bf16.mxu0 0
  %43 = vmatpush1.bf16.msra.mxu0 %v40
  %44 = vmatprep.subr.bf16.mxu0 0
  %45 = vmatpush1.bf16.msra.mxu0 0
  %46 = vmatprep.subr.bf16.mxu0 0
  %47 = vmatpush1.bf16.msra.mxu0 0
  %48 = vmatprep.subr.bf16.mxu0 0
  %49 = vmatpush1.bf16.msra.mxu0 0
  %50 = vmatprep.subr.bf16.mxu0 0
  %51 = vmatpush1.bf16.msra.mxu0 0
  %52 = vmatprep.subr.bf16.mxu0 0
  %53 = vmatpush1.bf16.msra.mxu0 0
  %54 = vmatprep.subr.bf16.mxu0 0
  %55 = vmatpush1.bf16.msra.mxu0 0
  %56 = vmatprep.subr.bf16.mxu0 0
  %57 = vmatpush1.bf16.msra.mxu0 0
  %58 = vmatprep.subr.bf16.mxu0 0
  %59 = vmatpush1.bf16.msra.mxu0 0
  %60 = vmatprep.subr.bf16.mxu0 0
  %61 = vmatpush1.bf16.msra.mxu0 0
  %62 = vmatprep.subr.bf16.mxu0 0
  %63 = vmatpush1.bf16.msra.mxu0 0
  %64 = vmatprep.subr.bf16.mxu0 0
  %65 = vmatpush1.bf16.msra.mxu0 0
  %66 = vmatprep.subr.bf16.mxu0 0
  %67 = vmatpush1.bf16.msra.mxu0 0
  %68 = vmatprep.subr.bf16.mxu0 0
  %69 = vmatpush1.bf16.msra.mxu0 0
  %70 = vmatprep.subr.bf16.mxu0 0
  %71 = vmatpush1.bf16.msra.mxu0 0
  %72 = vmatprep.subr.bf16.mxu0 0
  %73 = vmatpush1.bf16.msra.mxu0 0
  %74 = vmatprep.mubr.bf16.mxu0 0
  %75 = vmatmul.mubr.bf16.gmra.mrb[0].mxu0 %v36
  %v76 = vpop.f32.mrb[0].mxu0
  %v77 = vadd.f32 %v32, %v76
  %v78 = vpop.f32.mrb[0].mxu0
  %v79 = vpop.f32.mrb[0].mxu0
  %v80 = vpop.f32.mrb[0].mxu0
  %81 = vdwg.mxu0
  %v82 = vld [vmem:[%s3] sm:$0xff]
  %v83 = vadd.f32 %v77, %v82
  %84 = vst [vmem:[%s4] sm:$0xff] %v83
  // Predicated region
  $region18: #{encodec_decoder.26} parent=0 // pred_check
    _
  $region19: #{encodec_decoder.26} parent=0 // pred_check_branch
    %86 = sbr.rel (0) target = $region21
  $region20: #{encodec_decoder.26} parent=0 // pred_region
    _
  $region21: #{encodec_decoder.26} parent=0 // pred_fallthru
    _
  // Predicated region
  $region22: #{encodec_decoder.26} parent=0 // pred_check
    _
  $region23: #{encodec_decoder.26} parent=0 // pred_check_branch
    %88 = sbr.rel (0) target = $region25
  $region24: #{encodec_decoder.26} parent=0 // pred_region
    _
  $region25: #{encodec_decoder.26} parent=0 // pred_fallthru
    _

// kernel: encodec_decoder.27
$region0: #{encodec_decoder.27}
  #allocation0 [shape = 'u32[]', space=smem, size = 0x4, offset = 0x4, fixed_abs, tag = 'smem constant byte address 0x4 - core index']
  #allocation1 [shape = 'u32[144,128]{1,0:T(1,128)}', space=vmem, size = 0x12000, scoped, tag = 'internal scratch']
  %s0 = inlined_call_operand.vmem [shape: bf16[56,128], index: 0, kind: input, shape index: {}]
  %s1 = inlined_call_operand.vmem [shape: bf16[8,56], index: 1, kind: input, shape index: {}]
  %s2 = inlined_call_operand.vmem [shape: f32[8,1], index: 2, kind: input, shape index: {}]
  %s3 = inlined_call_operand.vmem [shape: f32[8,128], index: 3, kind: output, shape index: {}]
  %s4 = sld [smem:[#allocation0]]
  $region22: #{encodec_decoder.27} parent=0
    _
  %s6 = ssub.s32 1, %s4
  %s7 = scalar_select 0, %s6, %s4
  // Predicated region
  $region2: #{encodec_decoder.27} parent=0 // pred_check
    _
  $region3: #{encodec_decoder.27} parent=0 // pred_check_branch
    %9 = sbr.rel (0) target = $region5
  $region4: #{encodec_decoder.27} parent=0 // pred_region
    _
  $region5: #{encodec_decoder.27} parent=0 // pred_fallthru
    _
  // Predicated region
  $region6: #{encodec_decoder.27} parent=0 // pred_check
    _
  $region7: #{encodec_decoder.27} parent=0 // pred_check_branch
    %11 = sbr.rel (0) target = $region9
  $region8: #{encodec_decoder.27} parent=0 // pred_region
    _
  $region9: #{encodec_decoder.27} parent=0 // pred_fallthru
    _
  // Predicated region
  $region10: #{encodec_decoder.27} parent=0 // pred_check
    _
  $region11: #{encodec_decoder.27} parent=0 // pred_check_branch
    %13 = sbr.rel (0) target = $region13
  $region12: #{encodec_decoder.27} parent=0 // pred_region
    _
  $region13: #{encodec_decoder.27} parent=0 // pred_fallthru
    _
  %v15 = vld [vmem:[%s0] sm:$0xf]
  %v16 = vld [vmem:[%s0 + $0x4] sm:$0xf]
  %v17 = vld [vmem:[%s0 + $0x8] sm:$0xf]
  %v18 = vld [vmem:[%s0 + $0xc] sm:$0xf]
  %v19 = vld [vmem:[%s0 + $0x10] sm:$0xf]
  %v20 = vld [vmem:[%s0 + $0x14] sm:$0xf]
  %v21 = vld [vmem:[%s0 + $0x18] sm:$0xf]
  %v22 = vunpack.c.l.bf16 %v15
  %v23 = vunpack.c.l.bf16 %v16
  %v24 = vunpack.c.l.bf16 %v17
  %v25 = vunpack.c.l.bf16 %v18
  %v26 = vunpack.c.l.bf16 %v19
  %v27 = vunpack.c.l.bf16 %v20
  %v28 = vunpack.c.l.bf16 %v21
  %vm29 = vcmp.gt.f32.partialorder %v22, 0.0
  %vm30 = vcmp.gt.f32.partialorder %v23, 0.0
  %vm31 = vcmp.gt.f32.partialorder %v24, 0.0
  %vm32 = vcmp.gt.f32.partialorder %v25, 0.0
  %vm33 = vcmp.gt.f32.partialorder %v26, 0.0
  %vm34 = vcmp.gt.f32.partialorder %v27, 0.0
  %vm35 = vcmp.gt.f32.partialorder %v28, 0.0
  %v36 = vmin.f32 %v22, 0.0
  %v37 = vmin.f32 %v23, 0.0
  %v38 = vmin.f32 %v24, 0.0
  %v39 = vmin.f32 %v25, 0.0
  %v40 = vmin.f32 %v26, 0.0
  %v41 = vmin.f32 %v27, 0.0
  %v42 = vmin.f32 %v28, 0.0
  %v43 = vmul.f32 %v36, 1.442695
  %v44 = vpow.pop %v43
  %v45 = vmul.f32 %v37, 1.442695
  %v46 = vpow.pop %v45
  %v47 = vmul.f32 %v38, 1.442695
  %v48 = vpow.pop %v47
  %v49 = vmul.f32 %v39, 1.442695
  %v50 = vpow.pop %v49
  %v51 = vmul.f32 %v40, 1.442695
  %v52 = vpow.pop %v51
  %v53 = vmul.f32 %v41, 1.442695
  %v54 = vpow.pop %v53
  %v55 = vmul.f32 %v42, 1.442695
  %v56 = vpow.pop %v55
  %v57 = vsub.f32 %v44, 1.0
  %v58 = vsub.f32 %v46, 1.0
  %v59 = vsub.f32 %v48, 1.0
  %v60 = vsub.f32 %v50, 1.0
  %v61 = vsub.f32 %v52, 1.0
  %v62 = vsub.f32 %v54, 1.0
  %v63 = vsub.f32 %v56, 1.0
  %v64 = vsel %vm29, %v22, %v57
  %v65 = vsel %vm30, %v23, %v58
  %v66 = vsel %vm31, %v24, %v59
  %v67 = vsel %vm32, %v25, %v60
  %v68 = vsel %vm33, %v26, %v61
  %v69 = vsel %vm34, %v27, %v62
  %v70 = vsel %vm35, %v28, %v63
  %v71 = vpack.c.bf16 %v65, %v64
  %v72 = vpack.c.bf16 %v67, %v66
  %v73 = vpack.c.bf16 %v69, %v68
  %v74 = vpack.c.bf16 %v70, %v70
  %v75 = vld [vmem:[%s1] sm:$0xf]
  %v76 = vld [vmem:[%s2] sm:$0xff]
  %78 = vset.pattern.permute.xlu0 0
  %79 = vperm.xlu0 %78, %v76
  %v80 = vpop.permute.xlu0 %79
  %vm82 = vcmask 457728
  %v84 = vsel %vm82, %v75, 0
  %vm86 = vcmask 1043456
  %v88 = vsel %vm86, %v74, 0
  %90 = vmatprep.subr.bf16.mxu0 0
  %91 = vmatpush1.bf16.msra.mxu0 %v71
  %92 = vmatprep.subr.bf16.mxu0 0
  %93 = vmatpush1.bf16.msra.mxu0 %v72
  %94 = vmatprep.subr.bf16.mxu0 0
  %95 = vmatpush1.bf16.msra.mxu0 %v73
  %96 = vmatprep.subr.bf16.mxu0 0
  %97 = vmatpush1.bf16.msra.mxu0 %v88
  %98 = vmatprep.subr.bf16.mxu0 0
  %99 = vmatpush1.bf16.msra.mxu0 0
  %100 = vmatprep.subr.bf16.mxu0 0
  %101 = vmatpush1.bf16.msra.mxu0 0
  %102 = vmatprep.subr.bf16.mxu0 0
  %103 = vmatpush1.bf16.msra.mxu0 0
  %104 = vmatprep.subr.bf16.mxu0 0
  %105 = vmatpush1.bf16.msra.mxu0 0
  %106 = vmatprep.subr.bf16.mxu0 0
  %107 = vmatpush1.bf16.msra.mxu0 0
  %108 = vmatprep.subr.bf16.mxu0 0
  %109 = vmatpush1.bf16.msra.mxu0 0
  %110 = vmatprep.subr.bf16.mxu0 0
  %111 = vmatpush1.bf16.msra.mxu0 0
  %112 = vmatprep.subr.bf16.mxu0 0
  %113 = vmatpush1.bf16.msra.mxu0 0
  %114 = vmatprep.subr.bf16.mxu0 0
  %115 = vmatpush1.bf16.msra.mxu0 0
  %116 = vmatprep.subr.bf16.mxu0 0
  %117 = vmatpush1.bf16.msra.mxu0 0
  %118 = vmatprep.subr.bf16.mxu0 0
  %119 = vmatpush1.bf16.msra.mxu0 0
  %120 = vmatprep.subr.bf16.mxu0 0
  %121 = vmatpush1.bf16.msra.mxu0 0
  %122 = vmatprep.mubr.bf16.mxu0 0
  %123 = vmatmul.mubr.bf16.gmra.mrb[0].mxu0 %v84
  %v124 = vpop.f32.mrb[0].mxu0
  %v125 = vadd.f32 %v80, %v124
  %v126 = vpop.f32.mrb[0].mxu0
  %v127 = vpop.f32.mrb[0].mxu0
  %v128 = vpop.f32.mrb[0].mxu0
  %129 = vdwg.mxu0
  %130 = vst [vmem:[%s3] sm:$0xff] %v125
  // Predicated region
  $region14: #{encodec_decoder.27} parent=0 // pred_check
    _
  $region15: #{encodec_decoder.27} parent=0 // pred_check_branch
    %132 = sbr.rel (0) target = $region17
  $region16: #{encodec_decoder.27} parent=0 // pred_region
    _
  $region17: #{encodec_decoder.27} parent=0 // pred_fallthru
    _
  // Predicated region
  $region18: #{encodec_decoder.27} parent=0 // pred_check
    _
  $region19: #{encodec_decoder.27} parent=0 // pred_check_branch
    %134 = sbr.rel (0) target = $region21
  $region20: #{encodec_decoder.27} parent=0 // pred_region
    _
  $region21: #{encodec_decoder.27} parent=0 // pred_fallthru
    _

</llo_original>
